<compile_context>
chip_gen: v7x
topology: tpu7x:2x2x1
jax: 0.10.0
libtpu: 0.0.40
codegen_flags: <defaults>
</compile_context>

<pallas_src>
import jax
import jax.numpy as jnp
import numpy as np
from jax.experimental import pallas as pl
from jax.experimental.pallas import tpu as pltpu

_H3_PAD = 384    # FC3 width 300 padded to a lane multiple (lane 300 = const 1).
_OUT_PAD = 128   # FC4 weight padded to a full lane width (real column 0).


def critic_kernel(x_ref, w1_ref, w2o_ref, w2x_ref, w3_ref, b3_ref, w4_ref,
                  out_ref):
    x = x_ref[...]                                  # (tm, Din) bf16, Din = obs+act+1

    # FC1 + ReLU  (b1 folded into the ones row of w1; acts rows of w1 are 0)
    h1 = jnp.dot(x, w1_ref[...], preferred_element_type=jnp.float32)
    h1 = jnp.maximum(h1.astype(jnp.bfloat16), 0.0)

    # FC2 over the (implicit) concat [h1, acts] + ReLU, split-weight form;
    # b2 folded into the ones row of w2x.
    h2 = (jnp.dot(h1, w2o_ref[...], preferred_element_type=jnp.float32)
          + jnp.dot(x, w2x_ref[...], preferred_element_type=jnp.float32))
    h2 = jnp.maximum(h2.astype(jnp.bfloat16), 0.0)

    # FC3 + ReLU (300 padded to 384; lane 300 becomes exactly 1.0 and carries
    # b4 through FC4; lanes 301..383 stay exactly 0).
    h3 = jnp.dot(h2, w3_ref[...], preferred_element_type=jnp.float32)
    h3 = jnp.maximum(h3.astype(jnp.bfloat16) + b3_ref[...], 0.0)

    # FC4 (no activation). Real scalar in column 0; b4 comes from row 300.
    y = jnp.dot(h3, w4_ref[...], preferred_element_type=jnp.float32)  # (tm, 128)
    out_ref[...] = y[:, 0:1]                                          # (tm, 1) f32


def _round_up(x, m):
    return ((x + m - 1) // m) * m


def critic_forward(obs, acts, params, *, tile_m=512):
    """obs: (batch, n_agent*dim_obs) f32; acts: (batch, n_agent*dim_act) f32.

    Returns (batch, 1) f32, matching Critic.forward(obs, acts).
    """
    w1f, w2o, w2xf, w3p, b3p, w4p = params
    batch = obs.shape[0]
    din = w1f.shape[0]                       # obs_dim + act_dim + 1

    # One merged, bf16, lane-dense-ish input stream: [obs | acts | 1].
    ones = jnp.ones((batch, 1), obs.dtype)
    x = jnp.concatenate([obs, acts, ones], axis=1).astype(jnp.bfloat16)
    assert x.shape[1] == din

    # Batch tiling: minimal padding; >= 2 grid steps when batch allows so the
    # "parallel" batch axis can be sharded across TensorCores (v7x megacore).
    if batch > 8:
        n_tiles = max(2, pl.cdiv(batch, tile_m))
    else:
        n_tiles = 1
    tm = _round_up(pl.cdiv(batch, n_tiles), 8)
    padded = tm * n_tiles
    if padded != batch:
        x = jnp.pad(x, ((0, padded - batch), (0, 0)))

    row = lambda i: (i, 0)      # streamed per-tile blocks
    const = lambda i: (0, 0)    # VMEM-resident weights / biases

    out = pl.pallas_call(
        critic_kernel,
        out_shape=jax.ShapeDtypeStruct((padded, 1), jnp.float32),
        grid_spec=pltpu.PrefetchScalarGridSpec(
            num_scalar_prefetch=0,
            grid=(n_tiles,),
            in_specs=[
                pl.BlockSpec((tm, din), row),
                pl.BlockSpec(w1f.shape, const),
                pl.BlockSpec(w2o.shape, const),
                pl.BlockSpec(w2xf.shape, const),
                pl.BlockSpec(w3p.shape, const),
                pl.BlockSpec(b3p.shape, const),
                pl.BlockSpec(w4p.shape, const),
            ],
            out_specs=pl.BlockSpec((tm, 1), row),
        ),
        compiler_params=pltpu.CompilerParams(
            dimension_semantics=("parallel",),
            vmem_limit_bytes=48 * 1024 * 1024,
        ),
    )(x, w1f, w2o, w2xf, w3p, b3p, w4p)

    return out if padded == batch else out[:batch]


def init_linear(key, fan_in, fan_out):
    """PyTorch nn.Linear default init: U(-1/sqrt(fan_in), 1/sqrt(fan_in))."""
    kw, kb = jax.random.split(key)
    bound = 1.0 / np.sqrt(fan_in)
    w = jax.random.uniform(kw, (fan_in, fan_out), jnp.float32, -bound, bound)
    b = jax.random.uniform(kb, (1, fan_out), jnp.float32, -bound, bound)
    return w, b


def make_params(key, n_agent, dim_observation, dim_action):
    obs_dim = dim_observation * n_agent
    act_dim = dim_action * n_agent
    k1, k2, k3, k4 = jax.random.split(key, 4)
    w1, b1 = init_linear(k1, obs_dim, 1024)
    w2, b2 = init_linear(k2, 1024 + act_dim, 512)
    w3, b3 = init_linear(k3, 512, 300)
    w4, b4 = init_linear(k4, 300, 1)

    din = obs_dim + act_dim + 1

    # FC1 over x = [obs | acts | 1]: acts rows are 0, last row carries b1.
    w1f = jnp.zeros((din, 1024), jnp.float32)
    w1f = w1f.at[:obs_dim].set(w1).at[din - 1].set(b1[0])

    # FC2 split: h1-side weights, and the x-side weights (obs rows 0,
    # acts rows = W2[1024:], last row carries b2).
    w2o = w2[:1024, :]
    w2xf = jnp.zeros((din, 512), jnp.float32)
    w2xf = w2xf.at[obs_dim:obs_dim + act_dim].set(w2[1024:]).at[din - 1].set(b2[0])

    # FC3 output padded 300 -> 384; lane 300 is a constant-one channel
    # (weight column 0, bias 1) used to fold b4 into FC4's matmul.
    w3p = jnp.pad(w3, ((0, 0), (0, _H3_PAD - 300)))          # (512, 384)
    b3p = jnp.pad(b3, ((0, 0), (0, _H3_PAD - 300)))          # (1, 384)
    b3p = b3p.at[0, 300].set(1.0)

    # FC4 padded to (384, 128): real column 0, row 300 carries b4.
    w4p = jnp.zeros((_H3_PAD, _OUT_PAD), jnp.float32)
    w4p = w4p.at[:300, 0].set(w4[:, 0]).at[300, 0].set(b4[0, 0])

    bf16 = lambda a: a.astype(jnp.bfloat16)
    packed = (bf16(w1f), bf16(w2o), bf16(w2xf), bf16(w3p), bf16(b3p), bf16(w4p))
    raw = dict(w1=w1, b1=b1, w2=w2, b2=b2, w3=w3, b3=b3, w4=w4, b4=b4)
    return packed, raw


def reference_forward(obs, acts, p):
    """True f32 semantics of the original PyTorch Critic.forward."""
    h1 = jnp.maximum(obs @ p["w1"] + p["b1"], 0.0)
    combined = jnp.concatenate([h1, acts], axis=1)
    h2 = jnp.maximum(combined @ p["w2"] + p["b2"], 0.0)
    h3 = jnp.maximum(h2 @ p["w3"] + p["b3"], 0.0)
    return h3 @ p["w4"] + p["b4"]


if __name__ == "__main__":
    n_agent = 2
    dim_observation = 8
    dim_action = 4
    batch = 2

    key = jax.random.PRNGKey(0)
    k_params, k_obs, k_acts = jax.random.split(key, 3)

    params, raw = make_params(k_params, n_agent, dim_observation, dim_action)
    obs = jax.random.normal(k_obs, (batch, dim_observation * n_agent), jnp.float32)
    acts = jax.random.normal(k_acts, (batch, dim_action * n_agent), jnp.float32)

    out = critic_forward(obs, acts, params)
    out = jax.block_until_ready(out)

    ref = jax.block_until_ready(reference_forward(obs, acts, raw))
    # Kernel uses bf16 weights/activations with f32 accumulation; tolerance
    # bounds that quantization drift vs. the true f32 module.
    np.testing.assert_allclose(np.asarray(out), np.asarray(ref),
                               rtol=2e-2, atol=2e-2)

    print("KERNEL_OK")
</pallas_src>

<mosaic_0001>
module attributes {stable_mosaic.version = 11 : i64} {
  func.func @critic_kernel(%arg0: i32, %arg1: memref<8x25xbf16, #tpu.memory_space<vmem>>, %arg2: memref<25x1024xbf16, #tpu.memory_space<vmem>>, %arg3: memref<1024x512xbf16, #tpu.memory_space<vmem>>, %arg4: memref<25x512xbf16, #tpu.memory_space<vmem>>, %arg5: memref<512x384xbf16, #tpu.memory_space<vmem>>, %arg6: memref<1x384xbf16, #tpu.memory_space<vmem>>, %arg7: memref<384x128xbf16, #tpu.memory_space<vmem>>, %arg8: memref<8x1xf32, #tpu.memory_space<vmem>>) attributes {dimension_semantics = [#tpu.dimension_semantics<parallel>], iteration_bounds = array<i64: 1>, scalar_prefetch = 0 : i64, scratch_operands = 0 : i64, tpu.core_type = #tpu.core_type<tc>, window_params = [{transform_indices = @transform_0, window_bounds = array<i64: 8, 25>}, {pipeline_mode = #tpu.pipeline_mode<synchronous>, transform_indices = @transform_1, window_bounds = array<i64: 25, 1024>}, {pipeline_mode = #tpu.pipeline_mode<synchronous>, transform_indices = @transform_2, window_bounds = array<i64: 1024, 512>}, {pipeline_mode = #tpu.pipeline_mode<synchronous>, transform_indices = @transform_3, window_bounds = array<i64: 25, 512>}, {pipeline_mode = #tpu.pipeline_mode<synchronous>, transform_indices = @transform_4, window_bounds = array<i64: 512, 384>}, {pipeline_mode = #tpu.pipeline_mode<synchronous>, transform_indices = @transform_5, window_bounds = array<i64: 1, 384>}, {pipeline_mode = #tpu.pipeline_mode<synchronous>, transform_indices = @transform_6, window_bounds = array<i64: 384, 128>}, {transform_indices = @transform_7, window_bounds = array<i64: 8, 1>}]} {
    %c0 = arith.constant 0 : index
    %c0_0 = arith.constant 0 : index
    %0 = vector.load %arg1[%c0, %c0_0] : memref<8x25xbf16, #tpu.memory_space<vmem>>, vector<8x25xbf16>
    %c0_1 = arith.constant 0 : index
    %c0_2 = arith.constant 0 : index
    %1 = vector.load %arg2[%c0_1, %c0_2] : memref<25x1024xbf16, #tpu.memory_space<vmem>>, vector<25x1024xbf16>
    %cst = arith.constant dense<0.000000e+00> : vector<8x1024xf32>
    %2 = tpu.matmul %0, %1, %cst {dimension_numbers = #tpu.dot_dimension_numbers<[1], [0], [0], [1], [0, 0, 1, 1], [], []>} : vector<8x25xbf16>, vector<25x1024xbf16>, vector<8x1024xf32> -> vector<8x1024xf32>
    %3 = arith.truncf %2 : vector<8x1024xf32> to vector<8x1024xbf16>
    %cst_3 = arith.constant 0.000000e+00 : bf16
    %4 = vector.broadcast %cst_3 : bf16 to vector<8x1024xbf16>
    %5 = arith.maximumf %3, %4 : vector<8x1024xbf16>
    %c0_4 = arith.constant 0 : index
    %c0_5 = arith.constant 0 : index
    %6 = vector.load %arg3[%c0_4, %c0_5] : memref<1024x512xbf16, #tpu.memory_space<vmem>>, vector<1024x512xbf16>
    %cst_6 = arith.constant dense<0.000000e+00> : vector<8x512xf32>
    %7 = tpu.matmul %5, %6, %cst_6 {dimension_numbers = #tpu.dot_dimension_numbers<[1], [0], [0], [1], [0, 0, 1, 1], [], []>} : vector<8x1024xbf16>, vector<1024x512xbf16>, vector<8x512xf32> -> vector<8x512xf32>
    %c0_7 = arith.constant 0 : index
    %c0_8 = arith.constant 0 : index
    %8 = vector.load %arg4[%c0_7, %c0_8] : memref<25x512xbf16, #tpu.memory_space<vmem>>, vector<25x512xbf16>
    %cst_9 = arith.constant dense<0.000000e+00> : vector<8x512xf32>
    %9 = tpu.matmul %0, %8, %cst_9 {dimension_numbers = #tpu.dot_dimension_numbers<[1], [0], [0], [1], [0, 0, 1, 1], [], []>} : vector<8x25xbf16>, vector<25x512xbf16>, vector<8x512xf32> -> vector<8x512xf32>
    %10 = arith.addf %7, %9 : vector<8x512xf32>
    %11 = arith.truncf %10 : vector<8x512xf32> to vector<8x512xbf16>
    %cst_10 = arith.constant 0.000000e+00 : bf16
    %12 = vector.broadcast %cst_10 : bf16 to vector<8x512xbf16>
    %13 = arith.maximumf %11, %12 : vector<8x512xbf16>
    %c0_11 = arith.constant 0 : index
    %c0_12 = arith.constant 0 : index
    %14 = vector.load %arg5[%c0_11, %c0_12] : memref<512x384xbf16, #tpu.memory_space<vmem>>, vector<512x384xbf16>
    %cst_13 = arith.constant dense<0.000000e+00> : vector<8x384xf32>
    %15 = tpu.matmul %13, %14, %cst_13 {dimension_numbers = #tpu.dot_dimension_numbers<[1], [0], [0], [1], [0, 0, 1, 1], [], []>} : vector<8x512xbf16>, vector<512x384xbf16>, vector<8x384xf32> -> vector<8x384xf32>
    %16 = arith.truncf %15 : vector<8x384xf32> to vector<8x384xbf16>
    %c0_14 = arith.constant 0 : index
    %c0_15 = arith.constant 0 : index
    %17 = vector.load %arg6[%c0_14, %c0_15] : memref<1x384xbf16, #tpu.memory_space<vmem>>, vector<1x384xbf16>
    %18 = vector.broadcast %17 : vector<1x384xbf16> to vector<8x384xbf16>
    %19 = arith.addf %16, %18 : vector<8x384xbf16>
    %cst_16 = arith.constant 0.000000e+00 : bf16
    %20 = vector.broadcast %cst_16 : bf16 to vector<8x384xbf16>
    %21 = arith.maximumf %19, %20 : vector<8x384xbf16>
    %c0_17 = arith.constant 0 : index
    %c0_18 = arith.constant 0 : index
    %22 = vector.load %arg7[%c0_17, %c0_18] : memref<384x128xbf16, #tpu.memory_space<vmem>>, vector<384x128xbf16>
    %cst_19 = arith.constant dense<0.000000e+00> : vector<8x128xf32>
    %23 = tpu.matmul %21, %22, %cst_19 {dimension_numbers = #tpu.dot_dimension_numbers<[1], [0], [0], [1], [0, 0, 1, 1], [], []>} : vector<8x384xbf16>, vector<384x128xbf16>, vector<8x128xf32> -> vector<8x128xf32>
    %24 = vector.extract_strided_slice %23 {offsets = [0, 0], sizes = [8, 1], strides = [1, 1]} : vector<8x128xf32> to vector<8x1xf32>
    %c0_20 = arith.constant 0 : index
    %c0_21 = arith.constant 0 : index
    %25 = vector.load %arg8[%c0_20, %c0_21] : memref<8x1xf32, #tpu.memory_space<vmem>>, vector<8x1xf32>
    tpu.vector_store %arg8[%c0_20, %c0_21], %24 {strides = array<i32>} : memref<8x1xf32, #tpu.memory_space<vmem>>, vector<8x1xf32>,
    return
  }
  func.func @transform_0(%arg0: i32) -> (i32, i32) {
    %c0_i32 = arith.constant 0 : i32
    %c0_i32_0 = arith.constant 0 : i32
    return %arg0, %c0_i32 : i32, i32
  }
  func.func @transform_1(%arg0: i32) -> (i32, i32) {
    %c0_i32 = arith.constant 0 : i32
    %c0_i32_0 = arith.constant 0 : i32
    %c0_i32_1 = arith.constant 0 : i32
    return %c0_i32, %c0_i32_0 : i32, i32
  }
  func.func @transform_2(%arg0: i32) -> (i32, i32) {
    %c0_i32 = arith.constant 0 : i32
    %c0_i32_0 = arith.constant 0 : i32
    %c0_i32_1 = arith.constant 0 : i32
    return %c0_i32, %c0_i32_0 : i32, i32
  }
  func.func @transform_3(%arg0: i32) -> (i32, i32) {
    %c0_i32 = arith.constant 0 : i32
    %c0_i32_0 = arith.constant 0 : i32
    %c0_i32_1 = arith.constant 0 : i32
    return %c0_i32, %c0_i32_0 : i32, i32
  }
  func.func @transform_4(%arg0: i32) -> (i32, i32) {
    %c0_i32 = arith.constant 0 : i32
    %c0_i32_0 = arith.constant 0 : i32
    %c0_i32_1 = arith.constant 0 : i32
    return %c0_i32, %c0_i32_0 : i32, i32
  }
  func.func @transform_5(%arg0: i32) -> (i32, i32) {
    %c0_i32 = arith.constant 0 : i32
    %c0_i32_0 = arith.constant 0 : i32
    %c0_i32_1 = arith.constant 0 : i32
    return %c0_i32, %c0_i32_0 : i32, i32
  }
  func.func @transform_6(%arg0: i32) -> (i32, i32) {
    %c0_i32 = arith.constant 0 : i32
    %c0_i32_0 = arith.constant 0 : i32
    %c0_i32_1 = arith.constant 0 : i32
    return %c0_i32, %c0_i32_0 : i32, i32
  }
  func.func @transform_7(%arg0: i32) -> (i32, i32) {
    %c0_i32 = arith.constant 0 : i32
    %c0_i32_0 = arith.constant 0 : i32
    return %arg0, %c0_i32 : i32, i32
  }
}

</mosaic_0001>

<llo_original>
// kernel: tpu_custom_call.1
$region0: #{tpu_custom_call.1}
  #allocation0 [shape = 'u32[]', space=smem, size = 0x4, offset = 0x4, fixed_abs, tag = 'smem constant byte address 0x4 - core index']
  #allocation1 [shape = 'u32[144,128]{1,0:T(1,128)}', space=vmem, size = 0x12000, scoped, tag = 'internal scratch']
  %s0 = inlined_call_operand.hbm [shape: bf16[8,25], index: 0, kind: input, shape index: {}]
  %s1 = inlined_call_operand.hbm [shape: bf16[25,1024], index: 1, kind: input, shape index: {}]
  %s2 = inlined_call_operand.hbm [shape: bf16[1024,512], index: 2, kind: input, shape index: {}]
  %s3 = inlined_call_operand.hbm [shape: bf16[25,512], index: 3, kind: input, shape index: {}]
  %s4 = inlined_call_operand.hbm [shape: bf16[512,384], index: 4, kind: input, shape index: {}]
  %s5 = inlined_call_operand.vmem [shape: bf16[1,384], index: 5, kind: input, shape index: {}]
  %s6 = inlined_call_operand.hbm [shape: bf16[384,128], index: 6, kind: input, shape index: {}]
  %s7 = inlined_call_operand.vmem [shape: f32[8,1], index: 7, kind: output, shape index: {}]
  %s8 = sld [smem:[#allocation0]]
  $region62: #{tpu_custom_call.1} parent=0
    _
  %s10 = ssub.s32 1, %s8
  %s11 = scalar_select 0, %s10, %s8
  $region1: #{tpu_custom_call.1} parent=0
    #allocation2 [shape = 'u8[2048]{0}', space=vmem, size = 0x800, scoped, tag = 'input window, operand 0, single buffered']
    #allocation3 [shape = 's32[1]{0}', space=sflag, size = 0x4, scoped, tag = 'scoped memory for tpu_custom_call.1']
    #allocation4 [shape = 'u8[65536]{0}', space=vmem, size = 0x10000, scoped, tag = 'input window, operand 1, single buffered']
    #allocation5 [shape = 's32[1]{0}', space=sflag, size = 0x4, scoped, tag = 'scoped memory for tpu_custom_call.1']
    #allocation6 [shape = 'u8[1048576]{0}', space=vmem, size = 0x100000, scoped, tag = 'input window, operand 2, single buffered']
    #allocation7 [shape = 'u8[32768]{0}', space=vmem, size = 0x8000, scoped, tag = 'input window, operand 3, single buffered']
    #allocation8 [shape = 's32[1]{0}', space=sflag, size = 0x4, scoped, tag = 'scoped memory for tpu_custom_call.1']
    #allocation9 [shape = 'u8[393216]{0}', space=vmem, size = 0x60000, scoped, tag = 'input window, operand 4, single buffered']
    #allocation10 [shape = 'u8[98304]{0}', space=vmem, size = 0x18000, scoped, tag = 'input window, operand 6, single buffered']
    #allocation11 [shape = 's32[1]{0}', space=sflag, size = 0x4, scoped, tag = 'scoped memory for tpu_custom_call.1']
    %12 = vsyncpa [#allocation3], 0
    %13 = vsyncpa [#allocation5], 0
    %14 = vsyncpa [#allocation8], 0
    %15 = vsyncpa [#allocation11], 0
    // Predicated region
    $region2: #{tpu_custom_call.1} parent=1 // pred_check
      _
    $region3: #{tpu_custom_call.1} parent=1 // pred_check_branch
      %17 = sbr.rel (0) target = $region5
    $region4: #{tpu_custom_call.1} parent=1 // pred_region
      %s19 = ssub.s32 64, 64
      %20 = vsyncadd [#allocation3], %s19
      %s22 = sshll.u32 [#allocation2], 4
      %s23 = int_to_ptr.vmem [resolvable:$true] %s22
      %25 = dma.hbm_to_vmem [thread:$0]  %s0, 64, %s23, [#allocation3]
    $region5: #{tpu_custom_call.1} parent=1 // pred_fallthru
      _
    // Predicated region
    $region6: #{tpu_custom_call.1} parent=1 // pred_check
      _
    $region7: #{tpu_custom_call.1} parent=1 // pred_check_branch
      %27 = sbr.rel (0) target = $region9
    $region8: #{tpu_custom_call.1} parent=1 // pred_region
      %s29 = ssub.s32 2048, 2048
      %30 = vsyncadd [#allocation5], %s29
      %s31 = sshll.u32 [#allocation4], 4
      %s32 = int_to_ptr.vmem [resolvable:$true] %s31
      %37 = dma.hbm_to_vmem [thread:$0]  %s1, 2048, %s32, [#allocation5], 512, 512, 32
    $region9: #{tpu_custom_call.1} parent=1 // pred_fallthru
      _
    // Predicated region
    $region10: #{tpu_custom_call.1} parent=1 // pred_check
      _
    $region11: #{tpu_custom_call.1} parent=1 // pred_check_branch
      %39 = sbr.rel (0) target = $region13
    $region12: #{tpu_custom_call.1} parent=1 // pred_region
      %s41 = ssub.s32 32768, 32768
      %42 = vsyncadd [#allocation5], %s41
      %s43 = sshll.u32 [#allocation6], 4
      %s44 = int_to_ptr.vmem [resolvable:$true] %s43
      %49 = dma.hbm_to_vmem [thread:$0]  %s2, 32768, %s44, [#allocation5], 256, 256, 16
    $region13: #{tpu_custom_call.1} parent=1 // pred_fallthru
      _
    // Predicated region
    $region14: #{tpu_custom_call.1} parent=1 // pred_check
      _
    $region15: #{tpu_custom_call.1} parent=1 // pred_check_branch
      %51 = sbr.rel (0) target = $region17
    $region16: #{tpu_custom_call.1} parent=1 // pred_region
      %s53 = ssub.s32 1024, 1024
      %54 = vsyncadd [#allocation8], %s53
      %s55 = sshll.u32 [#allocation7], 4
      %s56 = int_to_ptr.vmem [resolvable:$true] %s55
      %61 = dma.hbm_to_vmem [thread:$0]  %s3, 1024, %s56, [#allocation8], 256, 256, 16
    $region17: #{tpu_custom_call.1} parent=1 // pred_fallthru
      _
    // Predicated region
    $region18: #{tpu_custom_call.1} parent=1 // pred_check
      _
    $region19: #{tpu_custom_call.1} parent=1 // pred_check_branch
      %63 = sbr.rel (0) target = $region21
    $region20: #{tpu_custom_call.1} parent=1 // pred_region
      %s65 = ssub.s32 12288, 12288
      %66 = vsyncadd [#allocation8], %s65
      %s67 = sshll.u32 [#allocation9], 4
      %s68 = int_to_ptr.vmem [resolvable:$true] %s67
      %73 = dma.hbm_to_vmem [thread:$0]  %s4, 12288, %s68, [#allocation8], 192, 192, 12
    $region21: #{tpu_custom_call.1} parent=1 // pred_fallthru
      _
    // Predicated region
    $region22: #{tpu_custom_call.1} parent=1 // pred_check
      _
    $region23: #{tpu_custom_call.1} parent=1 // pred_check_branch
      %75 = sbr.rel (0) target = $region25
    $region24: #{tpu_custom_call.1} parent=1 // pred_region
      _
    $region25: #{tpu_custom_call.1} parent=1 // pred_fallthru
      _
    // Predicated region
    $region26: #{tpu_custom_call.1} parent=1 // pred_check
      _
    $region27: #{tpu_custom_call.1} parent=1 // pred_check_branch
      %77 = sbr.rel (0) target = $region29
    $region28: #{tpu_custom_call.1} parent=1 // pred_region
      %s79 = ssub.s32 3072, 3072
      %80 = vsyncadd [#allocation11], %s79
      %s81 = sshll.u32 [#allocation10], 4
      %s82 = int_to_ptr.vmem [resolvable:$true] %s81
      %87 = dma.hbm_to_vmem [thread:$0]  %s6, 3072, %s82, [#allocation11], 64, 64, 4
    $region29: #{tpu_custom_call.1} parent=1 // pred_fallthru
      _
    // Predicated region
    $region30: #{tpu_custom_call.1} parent=1 // pred_check
      _
    $region31: #{tpu_custom_call.1} parent=1 // pred_check_branch
      %89 = sbr.rel (0) target = $region33
    $region32: #{tpu_custom_call.1} parent=1 // pred_region
      %90 = dma.done [#allocation3], 64
    $region33: #{tpu_custom_call.1} parent=1 // pred_fallthru
      _
    // Predicated region
    $region34: #{tpu_custom_call.1} parent=1 // pred_check
      _
    $region35: #{tpu_custom_call.1} parent=1 // pred_check_branch
      %92 = sbr.rel (0) target = $region37
    $region36: #{tpu_custom_call.1} parent=1 // pred_region
      %93 = dma.done [#allocation5], 2048
    $region37: #{tpu_custom_call.1} parent=1 // pred_fallthru
      _
    // Predicated region
    $region38: #{tpu_custom_call.1} parent=1 // pred_check
      _
    $region39: #{tpu_custom_call.1} parent=1 // pred_check_branch
      %95 = sbr.rel (0) target = $region41
    $region40: #{tpu_custom_call.1} parent=1 // pred_region
      %96 = dma.done [#allocation5], 32768
    $region41: #{tpu_custom_call.1} parent=1 // pred_fallthru
      _
    // Predicated region
    $region42: #{tpu_custom_call.1} parent=1 // pred_check
      _
    $region43: #{tpu_custom_call.1} parent=1 // pred_check_branch
      %98 = sbr.rel (0) target = $region45
    $region44: #{tpu_custom_call.1} parent=1 // pred_region
      %99 = dma.done [#allocation8], 1024
    $region45: #{tpu_custom_call.1} parent=1 // pred_fallthru
      _
    // Predicated region
    $region46: #{tpu_custom_call.1} parent=1 // pred_check
      _
    $region47: #{tpu_custom_call.1} parent=1 // pred_check_branch
      %101 = sbr.rel (0) target = $region49
    $region48: #{tpu_custom_call.1} parent=1 // pred_region
      %102 = dma.done [#allocation8], 12288
    $region49: #{tpu_custom_call.1} parent=1 // pred_fallthru
      _
    // Predicated region
    $region50: #{tpu_custom_call.1} parent=1 // pred_check
      _
    $region51: #{tpu_custom_call.1} parent=1 // pred_check_branch
      %104 = sbr.rel (0) target = $region53
    $region52: #{tpu_custom_call.1} parent=1 // pred_region
      %105 = dma.done [#allocation11], 3072
    $region53: #{tpu_custom_call.1} parent=1 // pred_fallthru
      _
    %v107 = vld [vmem:[#allocation2] sm:$0xf]
    %v108 = vld [vmem:[#allocation4] sm:$0xff]
    %v109 = vld [vmem:[#allocation4 + $0x8] sm:$0xff]
    %v110 = vld [vmem:[#allocation4 + $0x10] sm:$0xff]
    %v111 = vld [vmem:[#allocation4 + $0x18] sm:$0xff]
    %v112 = vld [vmem:[#allocation4 + $0x20] sm:$0xff]
    %v113 = vld [vmem:[#allocation4 + $0x28] sm:$0xff]
    %v114 = vld [vmem:[#allocation4 + $0x30] sm:$0xff]
    %v115 = vld [vmem:[#allocation4 + $0x38] sm:$0xff]
    %v116 = vld [vmem:[#allocation4 + $0x40] sm:$0xff]
    %v117 = vld [vmem:[#allocation4 + $0x48] sm:$0xff]
    %v118 = vld [vmem:[#allocation4 + $0x50] sm:$0xff]
    %v119 = vld [vmem:[#allocation4 + $0x58] sm:$0xff]
    %v120 = vld [vmem:[#allocation4 + $0x60] sm:$0x11]
    %v121 = vld [vmem:[#allocation4 + $0x68] sm:$0x11]
    %v122 = vld [vmem:[#allocation4 + $0x70] sm:$0x11]
    %v123 = vld [vmem:[#allocation4 + $0x78] sm:$0x11]
    %v140 = vunpack.c.l.b16 %v108
    %v141 = vunpack.c.h.b16 %v108
    %v142 = vunpack.c.l.b16 %v109
    %v143 = vunpack.c.h.b16 %v109
    %v144 = vunpack.c.l.b16 %v110
    %v145 = vunpack.c.h.b16 %v110
    %v146 = vunpack.c.l.b16 %v111
    %v147 = vunpack.c.h.b16 %v111
    %v148 = vunpack.c.l.b16 %v112
    %v149 = vunpack.c.h.b16 %v112
    %v150 = vunpack.c.l.b16 %v113
    %v151 = vunpack.c.h.b16 %v113
    %v152 = vunpack.c.l.b16 %v114
    %v153 = vunpack.c.h.b16 %v114
    %v154 = vunpack.c.l.b16 %v115
    %v155 = vunpack.c.h.b16 %v115
    %v156 = vunpack.c.l.b16 %v116
    %v157 = vunpack.c.h.b16 %v116
    %v158 = vunpack.c.l.b16 %v117
    %v159 = vunpack.c.h.b16 %v117
    %v160 = vunpack.c.l.b16 %v118
    %v161 = vunpack.c.h.b16 %v118
    %v162 = vunpack.c.l.b16 %v119
    %v163 = vunpack.c.h.b16 %v119
    %v164 = vunpack.c.l.b16 %v120
    %v165 = vunpack.c.h.b16 %v120
    %v166 = vunpack.c.l.b16 %v121
    %v167 = vunpack.c.h.b16 %v121
    %v168 = vunpack.c.l.b16 %v122
    %v169 = vunpack.c.h.b16 %v122
    %v170 = vunpack.c.l.b16 %v123
    %v171 = vunpack.c.h.b16 %v123
    %v172 = vpack.c.b16 %v148, %v140
    %v173 = vpack.c.b16 %v149, %v141
    %v174 = vpack.c.b16 %v150, %v142
    %v175 = vpack.c.b16 %v151, %v143
    %v176 = vpack.c.b16 %v152, %v144
    %v177 = vpack.c.b16 %v153, %v145
    %v178 = vpack.c.b16 %v154, %v146
    %v179 = vpack.c.b16 %v155, %v147
    %v180 = vpack.c.b16 %v164, %v156
    %v181 = vpack.c.b16 %v165, %v157
    %v182 = vpack.c.b16 %v166, %v158
    %v183 = vpack.c.b16 %v167, %v159
    %v184 = vpack.c.b16 %v168, %v160
    %v185 = vpack.c.b16 %v169, %v161
    %v186 = vpack.c.b16 %v170, %v162
    %v187 = vpack.c.b16 %v171, %v163
    %vm196 = vcmask 203776
    %v198 = vsel %vm196, %v107, 0
    %vm200 = vcmask 1043456
    %vm201 = vcmask 1044480
    %v202 = vsel %vm200, 4294967295, 65535
    %v203 = vsel %vm201, %v202, 0
    %v205 = vand.u32 %v180, %v203
    %v208 = vand.u32 %v181, %v203
    %v211 = vand.u32 %v182, %v203
    %v214 = vand.u32 %v183, %v203
    %v217 = vand.u32 %v184, %v203
    %v220 = vand.u32 %v185, %v203
    %v223 = vand.u32 %v186, %v203
    %v226 = vand.u32 %v187, %v203
    %228 = vmatprep.subr.bf16.mxu0 %v173
    %229 = vmatpush1.bf16.msra.mxu0 %v172
    %230 = vmatprep.subr.bf16.mxu0 %v208
    %231 = vmatpush1.bf16.msra.mxu0 %v205
    %232 = vmatprep.subr.bf16.mxu0 0
    %233 = vmatpush1.bf16.msra.mxu0 0
    %234 = vmatprep.subr.bf16.mxu0 0
    %235 = vmatpush1.bf16.msra.mxu0 0
    %236 = vmatprep.subr.bf16.mxu0 0
    %237 = vmatpush1.bf16.msra.mxu0 0
    %238 = vmatprep.subr.bf16.mxu0 0
    %239 = vmatpush1.bf16.msra.mxu0 0
    %240 = vmatprep.subr.bf16.mxu0 0
    %241 = vmatpush1.bf16.msra.mxu0 0
    %242 = vmatprep.subr.bf16.mxu0 0
    %243 = vmatpush1.bf16.msra.mxu0 0
    %244 = vmatprep.subr.bf16.mxu0 0
    %245 = vmatpush1.bf16.msra.mxu0 0
    %246 = vmatprep.subr.bf16.mxu0 0
    %247 = vmatpush1.bf16.msra.mxu0 0
    %248 = vmatprep.subr.bf16.mxu0 0
    %249 = vmatpush1.bf16.msra.mxu0 0
    %250 = vmatprep.subr.bf16.mxu0 0
    %251 = vmatpush1.bf16.msra.mxu0 0
    %252 = vmatprep.subr.bf16.mxu0 0
    %253 = vmatpush1.bf16.msra.mxu0 0
    %254 = vmatprep.subr.bf16.mxu0 0
    %255 = vmatpush1.bf16.msra.mxu0 0
    %256 = vmatprep.subr.bf16.mxu0 0
    %257 = vmatpush1.bf16.msra.mxu0 0
    %258 = vmatprep.subr.bf16.mxu0 0
    %259 = vmatpush1.bf16.msra.mxu0 0
    %260 = vmatprep.mubr.bf16.mxu0 0
    %261 = vmatmul.mubr.bf16.gmra.mrb[0].mxu0 %v198
    %v262 = vpop.f32.mrb[0].mxu0
    %v263 = vadd.f32 0.0, %v262
    %v264 = vpop.f32.mrb[0].mxu0
    %v265 = vadd.f32 0.0, %v264
    %v266 = vpop.f32.mrb[0].mxu0
    %v267 = vpop.f32.mrb[0].mxu0
    %268 = vdwg.mxu0
    %269 = vmatprep.subr.bf16.mxu0 %v175
    %270 = vmatpush1.bf16.msra.mxu0 %v174
    %271 = vmatprep.subr.bf16.mxu0 %v214
    %272 = vmatpush1.bf16.msra.mxu0 %v211
    %273 = vmatprep.subr.bf16.mxu0 0
    %274 = vmatpush1.bf16.msra.mxu0 0
    %275 = vmatprep.subr.bf16.mxu0 0
    %276 = vmatpush1.bf16.msra.mxu0 0
    %277 = vmatprep.subr.bf16.mxu0 0
    %278 = vmatpush1.bf16.msra.mxu0 0
    %279 = vmatprep.subr.bf16.mxu0 0
    %280 = vmatpush1.bf16.msra.mxu0 0
    %281 = vmatprep.subr.bf16.mxu0 0
    %282 = vmatpush1.bf16.msra.mxu0 0
    %283 = vmatprep.subr.bf16.mxu0 0
    %284 = vmatpush1.bf16.msra.mxu0 0
    %285 = vmatprep.subr.bf16.mxu0 0
    %286 = vmatpush1.bf16.msra.mxu0 0
    %287 = vmatprep.subr.bf16.mxu0 0
    %288 = vmatpush1.bf16.msra.mxu0 0
    %289 = vmatprep.subr.bf16.mxu0 0
    %290 = vmatpush1.bf16.msra.mxu0 0
    %291 = vmatprep.subr.bf16.mxu0 0
    %292 = vmatpush1.bf16.msra.mxu0 0
    %293 = vmatprep.subr.bf16.mxu0 0
    %294 = vmatpush1.bf16.msra.mxu0 0
    %295 = vmatprep.subr.bf16.mxu0 0
    %296 = vmatpush1.bf16.msra.mxu0 0
    %297 = vmatprep.subr.bf16.mxu0 0
    %298 = vmatpush1.bf16.msra.mxu0 0
    %299 = vmatprep.subr.bf16.mxu0 0
    %300 = vmatpush1.bf16.msra.mxu0 0
    %301 = vmatprep.mubr.bf16.mxu0 0
    %302 = vmatmul.mubr.bf16.gmra.mrb[0].mxu0 %v198
    %v303 = vpop.f32.mrb[0].mxu0
    %v304 = vadd.f32 0.0, %v303
    %v305 = vpop.f32.mrb[0].mxu0
    %v306 = vadd.f32 0.0, %v305
    %v307 = vpop.f32.mrb[0].mxu0
    %v308 = vpop.f32.mrb[0].mxu0
    %309 = vdwg.mxu0
    %310 = vmatprep.subr.bf16.mxu0 %v177
    %311 = vmatpush1.bf16.msra.mxu0 %v176
    %312 = vmatprep.subr.bf16.mxu0 %v220
    %313 = vmatpush1.bf16.msra.mxu0 %v217
    %314 = vmatprep.subr.bf16.mxu0 0
    %315 = vmatpush1.bf16.msra.mxu0 0
    %316 = vmatprep.subr.bf16.mxu0 0
    %317 = vmatpush1.bf16.msra.mxu0 0
    %318 = vmatprep.subr.bf16.mxu0 0
    %319 = vmatpush1.bf16.msra.mxu0 0
    %320 = vmatprep.subr.bf16.mxu0 0
    %321 = vmatpush1.bf16.msra.mxu0 0
    %322 = vmatprep.subr.bf16.mxu0 0
    %323 = vmatpush1.bf16.msra.mxu0 0
    %324 = vmatprep.subr.bf16.mxu0 0
    %325 = vmatpush1.bf16.msra.mxu0 0
    %326 = vmatprep.subr.bf16.mxu0 0
    %327 = vmatpush1.bf16.msra.mxu0 0
    %328 = vmatprep.subr.bf16.mxu0 0
    %329 = vmatpush1.bf16.msra.mxu0 0
    %330 = vmatprep.subr.bf16.mxu0 0
    %331 = vmatpush1.bf16.msra.mxu0 0
    %332 = vmatprep.subr.bf16.mxu0 0
    %333 = vmatpush1.bf16.msra.mxu0 0
    %334 = vmatprep.subr.bf16.mxu0 0
    %335 = vmatpush1.bf16.msra.mxu0 0
    %336 = vmatprep.subr.bf16.mxu0 0
    %337 = vmatpush1.bf16.msra.mxu0 0
    %338 = vmatprep.subr.bf16.mxu0 0
    %339 = vmatpush1.bf16.msra.mxu0 0
    %340 = vmatprep.subr.bf16.mxu0 0
    %341 = vmatpush1.bf16.msra.mxu0 0
    %342 = vmatprep.mubr.bf16.mxu0 0
    %343 = vmatmul.mubr.bf16.gmra.mrb[0].mxu0 %v198
    %v344 = vpop.f32.mrb[0].mxu0
    %v345 = vadd.f32 0.0, %v344
    %v346 = vpop.f32.mrb[0].mxu0
    %v347 = vadd.f32 0.0, %v346
    %v348 = vpop.f32.mrb[0].mxu0
    %v349 = vpop.f32.mrb[0].mxu0
    %350 = vdwg.mxu0
    %351 = vmatprep.subr.bf16.mxu0 %v179
    %352 = vmatpush1.bf16.msra.mxu0 %v178
    %353 = vmatprep.subr.bf16.mxu0 %v226
    %354 = vmatpush1.bf16.msra.mxu0 %v223
    %355 = vmatprep.subr.bf16.mxu0 0
    %356 = vmatpush1.bf16.msra.mxu0 0
    %357 = vmatprep.subr.bf16.mxu0 0
    %358 = vmatpush1.bf16.msra.mxu0 0
    %359 = vmatprep.subr.bf16.mxu0 0
    %360 = vmatpush1.bf16.msra.mxu0 0
    %361 = vmatprep.subr.bf16.mxu0 0
    %362 = vmatpush1.bf16.msra.mxu0 0
    %363 = vmatprep.subr.bf16.mxu0 0
    %364 = vmatpush1.bf16.msra.mxu0 0
    %365 = vmatprep.subr.bf16.mxu0 0
    %366 = vmatpush1.bf16.msra.mxu0 0
    %367 = vmatprep.subr.bf16.mxu0 0
    %368 = vmatpush1.bf16.msra.mxu0 0
    %369 = vmatprep.subr.bf16.mxu0 0
    %370 = vmatpush1.bf16.msra.mxu0 0
    %371 = vmatprep.subr.bf16.mxu0 0
    %372 = vmatpush1.bf16.msra.mxu0 0
    %373 = vmatprep.subr.bf16.mxu0 0
    %374 = vmatpush1.bf16.msra.mxu0 0
    %375 = vmatprep.subr.bf16.mxu0 0
    %376 = vmatpush1.bf16.msra.mxu0 0
    %377 = vmatprep.subr.bf16.mxu0 0
    %378 = vmatpush1.bf16.msra.mxu0 0
    %379 = vmatprep.subr.bf16.mxu0 0
    %380 = vmatpush1.bf16.msra.mxu0 0
    %381 = vmatprep.subr.bf16.mxu0 0
    %382 = vmatpush1.bf16.msra.mxu0 0
    %383 = vmatprep.mubr.bf16.mxu0 0
    %384 = vmatmul.mubr.bf16.gmra.mrb[0].mxu0 %v198
    %v385 = vpop.f32.mrb[0].mxu0
    %v386 = vadd.f32 0.0, %v385
    %v387 = vpop.f32.mrb[0].mxu0
    %v388 = vadd.f32 0.0, %v387
    %v389 = vpop.f32.mrb[0].mxu0
    %v390 = vpop.f32.mrb[0].mxu0
    %391 = vdwg.mxu0
    %v392 = vpack.c.bf16 %v263, %v263
    %v393 = vpack.c.bf16 %v265, %v265
    %v394 = vpack.c.bf16 %v304, %v304
    %v395 = vpack.c.bf16 %v306, %v306
    %v396 = vpack.c.bf16 %v345, %v345
    %v397 = vpack.c.bf16 %v347, %v347
    %v398 = vpack.c.bf16 %v386, %v386
    %v399 = vpack.c.bf16 %v388, %v388
    %v400 = vmax.bf16 %v392, 0
    %v401 = vmax.bf16 %v393, 0
    %v402 = vmax.bf16 %v394, 0
    %v403 = vmax.bf16 %v395, 0
    %v404 = vmax.bf16 %v396, 0
    %v405 = vmax.bf16 %v397, 0
    %v406 = vmax.bf16 %v398, 0
    %v407 = vmax.bf16 %v399, 0
    %v408 = vld [vmem:[#allocation6] sm:$0xff]
    %v409 = vld [vmem:[#allocation6 + $0x8] sm:$0xff]
    %v410 = vld [vmem:[#allocation6 + $0x10] sm:$0xff]
    %v411 = vld [vmem:[#allocation6 + $0x18] sm:$0xff]
    %v412 = vld [vmem:[#allocation6 + $0x20] sm:$0xff]
    %v413 = vld [vmem:[#allocation6 + $0x28] sm:$0xff]
    %v414 = vld [vmem:[#allocation6 + $0x30] sm:$0xff]
    %v415 = vld [vmem:[#allocation6 + $0x38] sm:$0xff]
    %v416 = vld [vmem:[#allocation6 + $0x40] sm:$0xff]
    %v417 = vld [vmem:[#allocation6 + $0x48] sm:$0xff]
    %v418 = vld [vmem:[#allocation6 + $0x50] sm:$0xff]
    %v419 = vld [vmem:[#allocation6 + $0x58] sm:$0xff]
    %v420 = vld [vmem:[#allocation6 + $0x60] sm:$0xff]
    %v421 = vld [vmem:[#allocation6 + $0x68] sm:$0xff]
    %v422 = vld [vmem:[#allocation6 + $0x70] sm:$0xff]
    %v423 = vld [vmem:[#allocation6 + $0x78] sm:$0xff]
    %v424 = vld [vmem:[#allocation6 + $0x80] sm:$0xff]
    %v425 = vld [vmem:[#allocation6 + $0x88] sm:$0xff]
    %v426 = vld [vmem:[#allocation6 + $0x90] sm:$0xff]
    %v427 = vld [vmem:[#allocation6 + $0x98] sm:$0xff]
    %v428 = vld [vmem:[#allocation6 + $0xa0] sm:$0xff]
    %v429 = vld [vmem:[#allocation6 + $0xa8] sm:$0xff]
    %v430 = vld [vmem:[#allocation6 + $0xb0] sm:$0xff]
    %v431 = vld [vmem:[#allocation6 + $0xb8] sm:$0xff]
    %v432 = vld [vmem:[#allocation6 + $0xc0] sm:$0xff]
    %v433 = vld [vmem:[#allocation6 + $0xc8] sm:$0xff]
    %v434 = vld [vmem:[#allocation6 + $0xd0] sm:$0xff]
    %v435 = vld [vmem:[#allocation6 + $0xd8] sm:$0xff]
    %v436 = vld [vmem:[#allocation6 + $0xe0] sm:$0xff]
    %v437 = vld [vmem:[#allocation6 + $0xe8] sm:$0xff]
    %v438 = vld [vmem:[#allocation6 + $0xf0] sm:$0xff]
    %v439 = vld [vmem:[#allocation6 + $0xf8] sm:$0xff]
    %v440 = vld [vmem:[#allocation6 + $0x100] sm:$0xff]
    %v441 = vld [vmem:[#allocation6 + $0x108] sm:$0xff]
    %v442 = vld [vmem:[#allocation6 + $0x110] sm:$0xff]
    %v443 = vld [vmem:[#allocation6 + $0x118] sm:$0xff]
    %v444 = vld [vmem:[#allocation6 + $0x120] sm:$0xff]
    %v445 = vld [vmem:[#allocation6 + $0x128] sm:$0xff]
    %v446 = vld [vmem:[#allocation6 + $0x130] sm:$0xff]
    %v447 = vld [vmem:[#allocation6 + $0x138] sm:$0xff]
    %v448 = vld [vmem:[#allocation6 + $0x140] sm:$0xff]
    %v449 = vld [vmem:[#allocation6 + $0x148] sm:$0xff]
    %v450 = vld [vmem:[#allocation6 + $0x150] sm:$0xff]
    %v451 = vld [vmem:[#allocation6 + $0x158] sm:$0xff]
    %v452 = vld [vmem:[#allocation6 + $0x160] sm:$0xff]
    %v453 = vld [vmem:[#allocation6 + $0x168] sm:$0xff]
    %v454 = vld [vmem:[#allocation6 + $0x170] sm:$0xff]
    %v455 = vld [vmem:[#allocation6 + $0x178] sm:$0xff]
    %v456 = vld [vmem:[#allocation6 + $0x180] sm:$0xff]
    %v457 = vld [vmem:[#allocation6 + $0x188] sm:$0xff]
    %v458 = vld [vmem:[#allocation6 + $0x190] sm:$0xff]
    %v459 = vld [vmem:[#allocation6 + $0x198] sm:$0xff]
    %v460 = vld [vmem:[#allocation6 + $0x1a0] sm:$0xff]
    %v461 = vld [vmem:[#allocation6 + $0x1a8] sm:$0xff]
    %v462 = vld [vmem:[#allocation6 + $0x1b0] sm:$0xff]
    %v463 = vld [vmem:[#allocation6 + $0x1b8] sm:$0xff]
    %v464 = vld [vmem:[#allocation6 + $0x1c0] sm:$0xff]
    %v465 = vld [vmem:[#allocation6 + $0x1c8] sm:$0xff]
    %v466 = vld [vmem:[#allocation6 + $0x1d0] sm:$0xff]
    %v467 = vld [vmem:[#allocation6 + $0x1d8] sm:$0xff]
    %v468 = vld [vmem:[#allocation6 + $0x1e0] sm:$0xff]
    %v469 = vld [vmem:[#allocation6 + $0x1e8] sm:$0xff]
    %v470 = vld [vmem:[#allocation6 + $0x1f0] sm:$0xff]
    %v471 = vld [vmem:[#allocation6 + $0x1f8] sm:$0xff]
    %v472 = vld [vmem:[#allocation6 + $0x200] sm:$0xff]
    %v473 = vld [vmem:[#allocation6 + $0x208] sm:$0xff]
    %v474 = vld [vmem:[#allocation6 + $0x210] sm:$0xff]
    %v475 = vld [vmem:[#allocation6 + $0x218] sm:$0xff]
    %v476 = vld [vmem:[#allocation6 + $0x220] sm:$0xff]
    %v477 = vld [vmem:[#allocation6 + $0x228] sm:$0xff]
    %v478 = vld [vmem:[#allocation6 + $0x230] sm:$0xff]
    %v479 = vld [vmem:[#allocation6 + $0x238] sm:$0xff]
    %v480 = vld [vmem:[#allocation6 + $0x240] sm:$0xff]
    %v481 = vld [vmem:[#allocation6 + $0x248] sm:$0xff]
    %v482 = vld [vmem:[#allocation6 + $0x250] sm:$0xff]
    %v483 = vld [vmem:[#allocation6 + $0x258] sm:$0xff]
    %v484 = vld [vmem:[#allocation6 + $0x260] sm:$0xff]
    %v485 = vld [vmem:[#allocation6 + $0x268] sm:$0xff]
    %v486 = vld [vmem:[#allocation6 + $0x270] sm:$0xff]
    %v487 = vld [vmem:[#allocation6 + $0x278] sm:$0xff]
    %v488 = vld [vmem:[#allocation6 + $0x280] sm:$0xff]
    %v489 = vld [vmem:[#allocation6 + $0x288] sm:$0xff]
    %v490 = vld [vmem:[#allocation6 + $0x290] sm:$0xff]
    %v491 = vld [vmem:[#allocation6 + $0x298] sm:$0xff]
    %v492 = vld [vmem:[#allocation6 + $0x2a0] sm:$0xff]
    %v493 = vld [vmem:[#allocation6 + $0x2a8] sm:$0xff]
    %v494 = vld [vmem:[#allocation6 + $0x2b0] sm:$0xff]
    %v495 = vld [vmem:[#allocation6 + $0x2b8] sm:$0xff]
    %v496 = vld [vmem:[#allocation6 + $0x2c0] sm:$0xff]
    %v497 = vld [vmem:[#allocation6 + $0x2c8] sm:$0xff]
    %v498 = vld [vmem:[#allocation6 + $0x2d0] sm:$0xff]
    %v499 = vld [vmem:[#allocation6 + $0x2d8] sm:$0xff]
    %v500 = vld [vmem:[#allocation6 + $0x2e0] sm:$0xff]
    %v501 = vld [vmem:[#allocation6 + $0x2e8] sm:$0xff]
    %v502 = vld [vmem:[#allocation6 + $0x2f0] sm:$0xff]
    %v503 = vld [vmem:[#allocation6 + $0x2f8] sm:$0xff]
    %v504 = vld [vmem:[#allocation6 + $0x300] sm:$0xff]
    %v505 = vld [vmem:[#allocation6 + $0x308] sm:$0xff]
    %v506 = vld [vmem:[#allocation6 + $0x310] sm:$0xff]
    %v507 = vld [vmem:[#allocation6 + $0x318] sm:$0xff]
    %v508 = vld [vmem:[#allocation6 + $0x320] sm:$0xff]
    %v509 = vld [vmem:[#allocation6 + $0x328] sm:$0xff]
    %v510 = vld [vmem:[#allocation6 + $0x330] sm:$0xff]
    %v511 = vld [vmem:[#allocation6 + $0x338] sm:$0xff]
    %v512 = vld [vmem:[#allocation6 + $0x340] sm:$0xff]
    %v513 = vld [vmem:[#allocation6 + $0x348] sm:$0xff]
    %v514 = vld [vmem:[#allocation6 + $0x350] sm:$0xff]
    %v515 = vld [vmem:[#allocation6 + $0x358] sm:$0xff]
    %v516 = vld [vmem:[#allocation6 + $0x360] sm:$0xff]
    %v517 = vld [vmem:[#allocation6 + $0x368] sm:$0xff]
    %v518 = vld [vmem:[#allocation6 + $0x370] sm:$0xff]
    %v519 = vld [vmem:[#allocation6 + $0x378] sm:$0xff]
    %v520 = vld [vmem:[#allocation6 + $0x380] sm:$0xff]
    %v521 = vld [vmem:[#allocation6 + $0x388] sm:$0xff]
    %v522 = vld [vmem:[#allocation6 + $0x390] sm:$0xff]
    %v523 = vld [vmem:[#allocation6 + $0x398] sm:$0xff]
    %v524 = vld [vmem:[#allocation6 + $0x3a0] sm:$0xff]
    %v525 = vld [vmem:[#allocation6 + $0x3a8] sm:$0xff]
    %v526 = vld [vmem:[#allocation6 + $0x3b0] sm:$0xff]
    %v527 = vld [vmem:[#allocation6 + $0x3b8] sm:$0xff]
    %v528 = vld [vmem:[#allocation6 + $0x3c0] sm:$0xff]
    %v529 = vld [vmem:[#allocation6 + $0x3c8] sm:$0xff]
    %v530 = vld [vmem:[#allocation6 + $0x3d0] sm:$0xff]
    %v531 = vld [vmem:[#allocation6 + $0x3d8] sm:$0xff]
    %v532 = vld [vmem:[#allocation6 + $0x3e0] sm:$0xff]
    %v533 = vld [vmem:[#allocation6 + $0x3e8] sm:$0xff]
    %v534 = vld [vmem:[#allocation6 + $0x3f0] sm:$0xff]
    %v535 = vld [vmem:[#allocation6 + $0x3f8] sm:$0xff]
    %v536 = vld [vmem:[#allocation6 + $0x400] sm:$0xff]
    %v537 = vld [vmem:[#allocation6 + $0x408] sm:$0xff]
    %v538 = vld [vmem:[#allocation6 + $0x410] sm:$0xff]
    %v539 = vld [vmem:[#allocation6 + $0x418] sm:$0xff]
    %v540 = vld [vmem:[#allocation6 + $0x420] sm:$0xff]
    %v541 = vld [vmem:[#allocation6 + $0x428] sm:$0xff]
    %v542 = vld [vmem:[#allocation6 + $0x430] sm:$0xff]
    %v543 = vld [vmem:[#allocation6 + $0x438] sm:$0xff]
    %v544 = vld [vmem:[#allocation6 + $0x440] sm:$0xff]
    %v545 = vld [vmem:[#allocation6 + $0x448] sm:$0xff]
    %v546 = vld [vmem:[#allocation6 + $0x450] sm:$0xff]
    %v547 = vld [vmem:[#allocation6 + $0x458] sm:$0xff]
    %v548 = vld [vmem:[#allocation6 + $0x460] sm:$0xff]
    %v549 = vld [vmem:[#allocation6 + $0x468] sm:$0xff]
    %v550 = vld [vmem:[#allocation6 + $0x470] sm:$0xff]
    %v551 = vld [vmem:[#allocation6 + $0x478] sm:$0xff]
    %v552 = vld [vmem:[#allocation6 + $0x480] sm:$0xff]
    %v553 = vld [vmem:[#allocation6 + $0x488] sm:$0xff]
    %v554 = vld [vmem:[#allocation6 + $0x490] sm:$0xff]
    %v555 = vld [vmem:[#allocation6 + $0x498] sm:$0xff]
    %v556 = vld [vmem:[#allocation6 + $0x4a0] sm:$0xff]
    %v557 = vld [vmem:[#allocation6 + $0x4a8] sm:$0xff]
    %v558 = vld [vmem:[#allocation6 + $0x4b0] sm:$0xff]
    %v559 = vld [vmem:[#allocation6 + $0x4b8] sm:$0xff]
    %v560 = vld [vmem:[#allocation6 + $0x4c0] sm:$0xff]
    %v561 = vld [vmem:[#allocation6 + $0x4c8] sm:$0xff]
    %v562 = vld [vmem:[#allocation6 + $0x4d0] sm:$0xff]
    %v563 = vld [vmem:[#allocation6 + $0x4d8] sm:$0xff]
    %v564 = vld [vmem:[#allocation6 + $0x4e0] sm:$0xff]
    %v565 = vld [vmem:[#allocation6 + $0x4e8] sm:$0xff]
    %v566 = vld [vmem:[#allocation6 + $0x4f0] sm:$0xff]
    %v567 = vld [vmem:[#allocation6 + $0x4f8] sm:$0xff]
    %v568 = vld [vmem:[#allocation6 + $0x500] sm:$0xff]
    %v569 = vld [vmem:[#allocation6 + $0x508] sm:$0xff]
    %v570 = vld [vmem:[#allocation6 + $0x510] sm:$0xff]
    %v571 = vld [vmem:[#allocation6 + $0x518] sm:$0xff]
    %v572 = vld [vmem:[#allocation6 + $0x520] sm:$0xff]
    %v573 = vld [vmem:[#allocation6 + $0x528] sm:$0xff]
    %v574 = vld [vmem:[#allocation6 + $0x530] sm:$0xff]
    %v575 = vld [vmem:[#allocation6 + $0x538] sm:$0xff]
    %v576 = vld [vmem:[#allocation6 + $0x540] sm:$0xff]
    %v577 = vld [vmem:[#allocation6 + $0x548] sm:$0xff]
    %v578 = vld [vmem:[#allocation6 + $0x550] sm:$0xff]
    %v579 = vld [vmem:[#allocation6 + $0x558] sm:$0xff]
    %v580 = vld [vmem:[#allocation6 + $0x560] sm:$0xff]
    %v581 = vld [vmem:[#allocation6 + $0x568] sm:$0xff]
    %v582 = vld [vmem:[#allocation6 + $0x570] sm:$0xff]
    %v583 = vld [vmem:[#allocation6 + $0x578] sm:$0xff]
    %v584 = vld [vmem:[#allocation6 + $0x580] sm:$0xff]
    %v585 = vld [vmem:[#allocation6 + $0x588] sm:$0xff]
    %v586 = vld [vmem:[#allocation6 + $0x590] sm:$0xff]
    %v587 = vld [vmem:[#allocation6 + $0x598] sm:$0xff]
    %v588 = vld [vmem:[#allocation6 + $0x5a0] sm:$0xff]
    %v589 = vld [vmem:[#allocation6 + $0x5a8] sm:$0xff]
    %v590 = vld [vmem:[#allocation6 + $0x5b0] sm:$0xff]
    %v591 = vld [vmem:[#allocation6 + $0x5b8] sm:$0xff]
    %v592 = vld [vmem:[#allocation6 + $0x5c0] sm:$0xff]
    %v593 = vld [vmem:[#allocation6 + $0x5c8] sm:$0xff]
    %v594 = vld [vmem:[#allocation6 + $0x5d0] sm:$0xff]
    %v595 = vld [vmem:[#allocation6 + $0x5d8] sm:$0xff]
    %v596 = vld [vmem:[#allocation6 + $0x5e0] sm:$0xff]
    %v597 = vld [vmem:[#allocation6 + $0x5e8] sm:$0xff]
    %v598 = vld [vmem:[#allocation6 + $0x5f0] sm:$0xff]
    %v599 = vld [vmem:[#allocation6 + $0x5f8] sm:$0xff]
    %v600 = vld [vmem:[#allocation6 + $0x600] sm:$0xff]
    %v601 = vld [vmem:[#allocation6 + $0x608] sm:$0xff]
    %v602 = vld [vmem:[#allocation6 + $0x610] sm:$0xff]
    %v603 = vld [vmem:[#allocation6 + $0x618] sm:$0xff]
    %v604 = vld [vmem:[#allocation6 + $0x620] sm:$0xff]
    %v605 = vld [vmem:[#allocation6 + $0x628] sm:$0xff]
    %v606 = vld [vmem:[#allocation6 + $0x630] sm:$0xff]
    %v607 = vld [vmem:[#allocation6 + $0x638] sm:$0xff]
    %v608 = vld [vmem:[#allocation6 + $0x640] sm:$0xff]
    %v609 = vld [vmem:[#allocation6 + $0x648] sm:$0xff]
    %v610 = vld [vmem:[#allocation6 + $0x650] sm:$0xff]
    %v611 = vld [vmem:[#allocation6 + $0x658] sm:$0xff]
    %v612 = vld [vmem:[#allocation6 + $0x660] sm:$0xff]
    %v613 = vld [vmem:[#allocation6 + $0x668] sm:$0xff]
    %v614 = vld [vmem:[#allocation6 + $0x670] sm:$0xff]
    %v615 = vld [vmem:[#allocation6 + $0x678] sm:$0xff]
    %v616 = vld [vmem:[#allocation6 + $0x680] sm:$0xff]
    %v617 = vld [vmem:[#allocation6 + $0x688] sm:$0xff]
    %v618 = vld [vmem:[#allocation6 + $0x690] sm:$0xff]
    %v619 = vld [vmem:[#allocation6 + $0x698] sm:$0xff]
    %v620 = vld [vmem:[#allocation6 + $0x6a0] sm:$0xff]
    %v621 = vld [vmem:[#allocation6 + $0x6a8] sm:$0xff]
    %v622 = vld [vmem:[#allocation6 + $0x6b0] sm:$0xff]
    %v623 = vld [vmem:[#allocation6 + $0x6b8] sm:$0xff]
    %v624 = vld [vmem:[#allocation6 + $0x6c0] sm:$0xff]
    %v625 = vld [vmem:[#allocation6 + $0x6c8] sm:$0xff]
    %v626 = vld [vmem:[#allocation6 + $0x6d0] sm:$0xff]
    %v627 = vld [vmem:[#allocation6 + $0x6d8] sm:$0xff]
    %v628 = vld [vmem:[#allocation6 + $0x6e0] sm:$0xff]
    %v629 = vld [vmem:[#allocation6 + $0x6e8] sm:$0xff]
    %v630 = vld [vmem:[#allocation6 + $0x6f0] sm:$0xff]
    %v631 = vld [vmem:[#allocation6 + $0x6f8] sm:$0xff]
    %v632 = vld [vmem:[#allocation6 + $0x700] sm:$0xff]
    %v633 = vld [vmem:[#allocation6 + $0x708] sm:$0xff]
    %v634 = vld [vmem:[#allocation6 + $0x710] sm:$0xff]
    %v635 = vld [vmem:[#allocation6 + $0x718] sm:$0xff]
    %v636 = vld [vmem:[#allocation6 + $0x720] sm:$0xff]
    %v637 = vld [vmem:[#allocation6 + $0x728] sm:$0xff]
    %v638 = vld [vmem:[#allocation6 + $0x730] sm:$0xff]
    %v639 = vld [vmem:[#allocation6 + $0x738] sm:$0xff]
    %v640 = vld [vmem:[#allocation6 + $0x740] sm:$0xff]
    %v641 = vld [vmem:[#allocation6 + $0x748] sm:$0xff]
    %v642 = vld [vmem:[#allocation6 + $0x750] sm:$0xff]
    %v643 = vld [vmem:[#allocation6 + $0x758] sm:$0xff]
    %v644 = vld [vmem:[#allocation6 + $0x760] sm:$0xff]
    %v645 = vld [vmem:[#allocation6 + $0x768] sm:$0xff]
    %v646 = vld [vmem:[#allocation6 + $0x770] sm:$0xff]
    %v647 = vld [vmem:[#allocation6 + $0x778] sm:$0xff]
    %v648 = vld [vmem:[#allocation6 + $0x780] sm:$0xff]
    %v649 = vld [vmem:[#allocation6 + $0x788] sm:$0xff]
    %v650 = vld [vmem:[#allocation6 + $0x790] sm:$0xff]
    %v651 = vld [vmem:[#allocation6 + $0x798] sm:$0xff]
    %v652 = vld [vmem:[#allocation6 + $0x7a0] sm:$0xff]
    %v653 = vld [vmem:[#allocation6 + $0x7a8] sm:$0xff]
    %v654 = vld [vmem:[#allocation6 + $0x7b0] sm:$0xff]
    %v655 = vld [vmem:[#allocation6 + $0x7b8] sm:$0xff]
    %v656 = vld [vmem:[#allocation6 + $0x7c0] sm:$0xff]
    %v657 = vld [vmem:[#allocation6 + $0x7c8] sm:$0xff]
    %v658 = vld [vmem:[#allocation6 + $0x7d0] sm:$0xff]
    %v659 = vld [vmem:[#allocation6 + $0x7d8] sm:$0xff]
    %v660 = vld [vmem:[#allocation6 + $0x7e0] sm:$0xff]
    %v661 = vld [vmem:[#allocation6 + $0x7e8] sm:$0xff]
    %v662 = vld [vmem:[#allocation6 + $0x7f0] sm:$0xff]
    %v663 = vld [vmem:[#allocation6 + $0x7f8] sm:$0xff]
    %v664 = vld [vmem:[#allocation7] sm:$0xff]
    %v665 = vld [vmem:[#allocation7 + $0x8] sm:$0xff]
    %v666 = vld [vmem:[#allocation7 + $0x10] sm:$0xff]
    %v667 = vld [vmem:[#allocation7 + $0x18] sm:$0xff]
    %v668 = vld [vmem:[#allocation7 + $0x20] sm:$0xff]
    %v669 = vld [vmem:[#allocation7 + $0x28] sm:$0xff]
    %v670 = vld [vmem:[#allocation7 + $0x30] sm:$0x11]
    %v671 = vld [vmem:[#allocation7 + $0x38] sm:$0x11]
    %v680 = vunpack.c.l.b16 %v664
    %v681 = vunpack.c.h.b16 %v664
    %v682 = vunpack.c.l.b16 %v665
    %v683 = vunpack.c.h.b16 %v665
    %v684 = vunpack.c.l.b16 %v666
    %v685 = vunpack.c.h.b16 %v666
    %v686 = vunpack.c.l.b16 %v667
    %v687 = vunpack.c.h.b16 %v667
    %v688 = vunpack.c.l.b16 %v668
    %v689 = vunpack.c.h.b16 %v668
    %v690 = vunpack.c.l.b16 %v669
    %v691 = vunpack.c.h.b16 %v669
    %v692 = vunpack.c.l.b16 %v670
    %v693 = vunpack.c.h.b16 %v670
    %v694 = vunpack.c.l.b16 %v671
    %v695 = vunpack.c.h.b16 %v671
    %v696 = vpack.c.b16 %v684, %v680
    %v697 = vpack.c.b16 %v685, %v681
    %v698 = vpack.c.b16 %v686, %v682
    %v699 = vpack.c.b16 %v687, %v683
    %v700 = vpack.c.b16 %v692, %v688
    %v701 = vpack.c.b16 %v693, %v689
    %v702 = vpack.c.b16 %v694, %v690
    %v703 = vpack.c.b16 %v695, %v691
    %v709 = vand.u32 %v700, %v203
    %v712 = vand.u32 %v701, %v203
    %v715 = vand.u32 %v702, %v203
    %v718 = vand.u32 %v703, %v203
    %720 = vmatprep.subr.bf16.mxu0 %v697
    %721 = vmatpush1.bf16.msra.mxu0 %v696
    %722 = vmatprep.subr.bf16.mxu0 %v712
    %723 = vmatpush1.bf16.msra.mxu0 %v709
    %724 = vmatprep.subr.bf16.mxu0 0
    %725 = vmatpush1.bf16.msra.mxu0 0
    %726 = vmatprep.subr.bf16.mxu0 0
    %727 = vmatpush1.bf16.msra.mxu0 0
    %728 = vmatprep.subr.bf16.mxu0 0
    %729 = vmatpush1.bf16.msra.mxu0 0
    %730 = vmatprep.subr.bf16.mxu0 0
    %731 = vmatpush1.bf16.msra.mxu0 0
    %732 = vmatprep.subr.bf16.mxu0 0
    %733 = vmatpush1.bf16.msra.mxu0 0
    %734 = vmatprep.subr.bf16.mxu0 0
    %735 = vmatpush1.bf16.msra.mxu0 0
    %736 = vmatprep.subr.bf16.mxu0 0
    %737 = vmatpush1.bf16.msra.mxu0 0
    %738 = vmatprep.subr.bf16.mxu0 0
    %739 = vmatpush1.bf16.msra.mxu0 0
    %740 = vmatprep.subr.bf16.mxu0 0
    %741 = vmatpush1.bf16.msra.mxu0 0
    %742 = vmatprep.subr.bf16.mxu0 0
    %743 = vmatpush1.bf16.msra.mxu0 0
    %744 = vmatprep.subr.bf16.mxu0 0
    %745 = vmatpush1.bf16.msra.mxu0 0
    %746 = vmatprep.subr.bf16.mxu0 0
    %747 = vmatpush1.bf16.msra.mxu0 0
    %748 = vmatprep.subr.bf16.mxu0 0
    %749 = vmatpush1.bf16.msra.mxu0 0
    %750 = vmatprep.subr.bf16.mxu0 0
    %751 = vmatpush1.bf16.msra.mxu0 0
    %752 = vmatprep.mubr.bf16.mxu0 0
    %753 = vmatmul.mubr.bf16.gmra.mrb[0].mxu0 %v198
    %v754 = vpop.f32.mrb[0].mxu0
    %v755 = vadd.f32 0.0, %v754
    %v756 = vpop.f32.mrb[0].mxu0
    %v757 = vadd.f32 0.0, %v756
    %v758 = vpop.f32.mrb[0].mxu0
    %v759 = vpop.f32.mrb[0].mxu0
    %760 = vdwg.mxu0
    %761 = vmatprep.subr.bf16.mxu0 %v699
    %762 = vmatpush1.bf16.msra.mxu0 %v698
    %763 = vmatprep.subr.bf16.mxu0 %v718
    %764 = vmatpush1.bf16.msra.mxu0 %v715
    %765 = vmatprep.subr.bf16.mxu0 0
    %766 = vmatpush1.bf16.msra.mxu0 0
    %767 = vmatprep.subr.bf16.mxu0 0
    %768 = vmatpush1.bf16.msra.mxu0 0
    %769 = vmatprep.subr.bf16.mxu0 0
    %770 = vmatpush1.bf16.msra.mxu0 0
    %771 = vmatprep.subr.bf16.mxu0 0
    %772 = vmatpush1.bf16.msra.mxu0 0
    %773 = vmatprep.subr.bf16.mxu0 0
    %774 = vmatpush1.bf16.msra.mxu0 0
    %775 = vmatprep.subr.bf16.mxu0 0
    %776 = vmatpush1.bf16.msra.mxu0 0
    %777 = vmatprep.subr.bf16.mxu0 0
    %778 = vmatpush1.bf16.msra.mxu0 0
    %779 = vmatprep.subr.bf16.mxu0 0
    %780 = vmatpush1.bf16.msra.mxu0 0
    %781 = vmatprep.subr.bf16.mxu0 0
    %782 = vmatpush1.bf16.msra.mxu0 0
    %783 = vmatprep.subr.bf16.mxu0 0
    %784 = vmatpush1.bf16.msra.mxu0 0
    %785 = vmatprep.subr.bf16.mxu0 0
    %786 = vmatpush1.bf16.msra.mxu0 0
    %787 = vmatprep.subr.bf16.mxu0 0
    %788 = vmatpush1.bf16.msra.mxu0 0
    %789 = vmatprep.subr.bf16.mxu0 0
    %790 = vmatpush1.bf16.msra.mxu0 0
    %791 = vmatprep.subr.bf16.mxu0 0
    %792 = vmatpush1.bf16.msra.mxu0 0
    %793 = vmatprep.mubr.bf16.mxu0 0
    %794 = vmatmul.mubr.bf16.gmra.mrb[0].mxu0 %v198
    %v795 = vpop.f32.mrb[0].mxu0
    %v796 = vadd.f32 0.0, %v795
    %v797 = vpop.f32.mrb[0].mxu0
    %v798 = vadd.f32 0.0, %v797
    %v799 = vpop.f32.mrb[0].mxu0
    %v800 = vpop.f32.mrb[0].mxu0
    %801 = vdwg.mxu0
    %v1058 = vunpack.c.l.b16 %v408
    %v1059 = vunpack.c.h.b16 %v408
    %v1060 = vunpack.c.l.b16 %v409
    %v1061 = vunpack.c.h.b16 %v409
    %v1062 = vunpack.c.l.b16 %v410
    %v1063 = vunpack.c.h.b16 %v410
    %v1064 = vunpack.c.l.b16 %v411
    %v1065 = vunpack.c.h.b16 %v411
    %v1066 = vunpack.c.l.b16 %v412
    %v1067 = vunpack.c.h.b16 %v412
    %v1068 = vunpack.c.l.b16 %v413
    %v1069 = vunpack.c.h.b16 %v413
    %v1070 = vunpack.c.l.b16 %v414
    %v1071 = vunpack.c.h.b16 %v414
    %v1072 = vunpack.c.l.b16 %v415
    %v1073 = vunpack.c.h.b16 %v415
    %v1074 = vunpack.c.l.b16 %v416
    %v1075 = vunpack.c.h.b16 %v416
    %v1076 = vunpack.c.l.b16 %v417
    %v1077 = vunpack.c.h.b16 %v417
    %v1078 = vunpack.c.l.b16 %v418
    %v1079 = vunpack.c.h.b16 %v418
    %v1080 = vunpack.c.l.b16 %v419
    %v1081 = vunpack.c.h.b16 %v419
    %v1082 = vunpack.c.l.b16 %v420
    %v1083 = vunpack.c.h.b16 %v420
    %v1084 = vunpack.c.l.b16 %v421
    %v1085 = vunpack.c.h.b16 %v421
    %v1086 = vunpack.c.l.b16 %v422
    %v1087 = vunpack.c.h.b16 %v422
    %v1088 = vunpack.c.l.b16 %v423
    %v1089 = vunpack.c.h.b16 %v423
    %v1090 = vunpack.c.l.b16 %v424
    %v1091 = vunpack.c.h.b16 %v424
    %v1092 = vunpack.c.l.b16 %v425
    %v1093 = vunpack.c.h.b16 %v425
    %v1094 = vunpack.c.l.b16 %v426
    %v1095 = vunpack.c.h.b16 %v426
    %v1096 = vunpack.c.l.b16 %v427
    %v1097 = vunpack.c.h.b16 %v427
    %v1098 = vunpack.c.l.b16 %v428
    %v1099 = vunpack.c.h.b16 %v428
    %v1100 = vunpack.c.l.b16 %v429
    %v1101 = vunpack.c.h.b16 %v429
    %v1102 = vunpack.c.l.b16 %v430
    %v1103 = vunpack.c.h.b16 %v430
    %v1104 = vunpack.c.l.b16 %v431
    %v1105 = vunpack.c.h.b16 %v431
    %v1106 = vunpack.c.l.b16 %v432
    %v1107 = vunpack.c.h.b16 %v432
    %v1108 = vunpack.c.l.b16 %v433
    %v1109 = vunpack.c.h.b16 %v433
    %v1110 = vunpack.c.l.b16 %v434
    %v1111 = vunpack.c.h.b16 %v434
    %v1112 = vunpack.c.l.b16 %v435
    %v1113 = vunpack.c.h.b16 %v435
    %v1114 = vunpack.c.l.b16 %v436
    %v1115 = vunpack.c.h.b16 %v436
    %v1116 = vunpack.c.l.b16 %v437
    %v1117 = vunpack.c.h.b16 %v437
    %v1118 = vunpack.c.l.b16 %v438
    %v1119 = vunpack.c.h.b16 %v438
    %v1120 = vunpack.c.l.b16 %v439
    %v1121 = vunpack.c.h.b16 %v439
    %v1122 = vunpack.c.l.b16 %v440
    %v1123 = vunpack.c.h.b16 %v440
    %v1124 = vunpack.c.l.b16 %v441
    %v1125 = vunpack.c.h.b16 %v441
    %v1126 = vunpack.c.l.b16 %v442
    %v1127 = vunpack.c.h.b16 %v442
    %v1128 = vunpack.c.l.b16 %v443
    %v1129 = vunpack.c.h.b16 %v443
    %v1130 = vunpack.c.l.b16 %v444
    %v1131 = vunpack.c.h.b16 %v444
    %v1132 = vunpack.c.l.b16 %v445
    %v1133 = vunpack.c.h.b16 %v445
    %v1134 = vunpack.c.l.b16 %v446
    %v1135 = vunpack.c.h.b16 %v446
    %v1136 = vunpack.c.l.b16 %v447
    %v1137 = vunpack.c.h.b16 %v447
    %v1138 = vunpack.c.l.b16 %v448
    %v1139 = vunpack.c.h.b16 %v448
    %v1140 = vunpack.c.l.b16 %v449
    %v1141 = vunpack.c.h.b16 %v449
    %v1142 = vunpack.c.l.b16 %v450
    %v1143 = vunpack.c.h.b16 %v450
    %v1144 = vunpack.c.l.b16 %v451
    %v1145 = vunpack.c.h.b16 %v451
    %v1146 = vunpack.c.l.b16 %v452
    %v1147 = vunpack.c.h.b16 %v452
    %v1148 = vunpack.c.l.b16 %v453
    %v1149 = vunpack.c.h.b16 %v453
    %v1150 = vunpack.c.l.b16 %v454
    %v1151 = vunpack.c.h.b16 %v454
    %v1152 = vunpack.c.l.b16 %v455
    %v1153 = vunpack.c.h.b16 %v455
    %v1154 = vunpack.c.l.b16 %v456
    %v1155 = vunpack.c.h.b16 %v456
    %v1156 = vunpack.c.l.b16 %v457
    %v1157 = vunpack.c.h.b16 %v457
    %v1158 = vunpack.c.l.b16 %v458
    %v1159 = vunpack.c.h.b16 %v458
    %v1160 = vunpack.c.l.b16 %v459
    %v1161 = vunpack.c.h.b16 %v459
    %v1162 = vunpack.c.l.b16 %v460
    %v1163 = vunpack.c.h.b16 %v460
    %v1164 = vunpack.c.l.b16 %v461
    %v1165 = vunpack.c.h.b16 %v461
    %v1166 = vunpack.c.l.b16 %v462
    %v1167 = vunpack.c.h.b16 %v462
    %v1168 = vunpack.c.l.b16 %v463
    %v1169 = vunpack.c.h.b16 %v463
    %v1170 = vunpack.c.l.b16 %v464
    %v1171 = vunpack.c.h.b16 %v464
    %v1172 = vunpack.c.l.b16 %v465
    %v1173 = vunpack.c.h.b16 %v465
    %v1174 = vunpack.c.l.b16 %v466
    %v1175 = vunpack.c.h.b16 %v466
    %v1176 = vunpack.c.l.b16 %v467
    %v1177 = vunpack.c.h.b16 %v467
    %v1178 = vunpack.c.l.b16 %v468
    %v1179 = vunpack.c.h.b16 %v468
    %v1180 = vunpack.c.l.b16 %v469
    %v1181 = vunpack.c.h.b16 %v469
    %v1182 = vunpack.c.l.b16 %v470
    %v1183 = vunpack.c.h.b16 %v470
    %v1184 = vunpack.c.l.b16 %v471
    %v1185 = vunpack.c.h.b16 %v471
    %v1186 = vunpack.c.l.b16 %v472
    %v1187 = vunpack.c.h.b16 %v472
    %v1188 = vunpack.c.l.b16 %v473
    %v1189 = vunpack.c.h.b16 %v473
    %v1190 = vunpack.c.l.b16 %v474
    %v1191 = vunpack.c.h.b16 %v474
    %v1192 = vunpack.c.l.b16 %v475
    %v1193 = vunpack.c.h.b16 %v475
    %v1194 = vunpack.c.l.b16 %v476
    %v1195 = vunpack.c.h.b16 %v476
    %v1196 = vunpack.c.l.b16 %v477
    %v1197 = vunpack.c.h.b16 %v477
    %v1198 = vunpack.c.l.b16 %v478
    %v1199 = vunpack.c.h.b16 %v478
    %v1200 = vunpack.c.l.b16 %v479
    %v1201 = vunpack.c.h.b16 %v479
    %v1202 = vunpack.c.l.b16 %v480
    %v1203 = vunpack.c.h.b16 %v480
    %v1204 = vunpack.c.l.b16 %v481
    %v1205 = vunpack.c.h.b16 %v481
    %v1206 = vunpack.c.l.b16 %v482
    %v1207 = vunpack.c.h.b16 %v482
    %v1208 = vunpack.c.l.b16 %v483
    %v1209 = vunpack.c.h.b16 %v483
    %v1210 = vunpack.c.l.b16 %v484
    %v1211 = vunpack.c.h.b16 %v484
    %v1212 = vunpack.c.l.b16 %v485
    %v1213 = vunpack.c.h.b16 %v485
    %v1214 = vunpack.c.l.b16 %v486
    %v1215 = vunpack.c.h.b16 %v486
    %v1216 = vunpack.c.l.b16 %v487
    %v1217 = vunpack.c.h.b16 %v487
    %v1218 = vunpack.c.l.b16 %v488
    %v1219 = vunpack.c.h.b16 %v488
    %v1220 = vunpack.c.l.b16 %v489
    %v1221 = vunpack.c.h.b16 %v489
    %v1222 = vunpack.c.l.b16 %v490
    %v1223 = vunpack.c.h.b16 %v490
    %v1224 = vunpack.c.l.b16 %v491
    %v1225 = vunpack.c.h.b16 %v491
    %v1226 = vunpack.c.l.b16 %v492
    %v1227 = vunpack.c.h.b16 %v492
    %v1228 = vunpack.c.l.b16 %v493
    %v1229 = vunpack.c.h.b16 %v493
    %v1230 = vunpack.c.l.b16 %v494
    %v1231 = vunpack.c.h.b16 %v494
    %v1232 = vunpack.c.l.b16 %v495
    %v1233 = vunpack.c.h.b16 %v495
    %v1234 = vunpack.c.l.b16 %v496
    %v1235 = vunpack.c.h.b16 %v496
    %v1236 = vunpack.c.l.b16 %v497
    %v1237 = vunpack.c.h.b16 %v497
    %v1238 = vunpack.c.l.b16 %v498
    %v1239 = vunpack.c.h.b16 %v498
    %v1240 = vunpack.c.l.b16 %v499
    %v1241 = vunpack.c.h.b16 %v499
    %v1242 = vunpack.c.l.b16 %v500
    %v1243 = vunpack.c.h.b16 %v500
    %v1244 = vunpack.c.l.b16 %v501
    %v1245 = vunpack.c.h.b16 %v501
    %v1246 = vunpack.c.l.b16 %v502
    %v1247 = vunpack.c.h.b16 %v502
    %v1248 = vunpack.c.l.b16 %v503
    %v1249 = vunpack.c.h.b16 %v503
    %v1250 = vunpack.c.l.b16 %v504
    %v1251 = vunpack.c.h.b16 %v504
    %v1252 = vunpack.c.l.b16 %v505
    %v1253 = vunpack.c.h.b16 %v505
    %v1254 = vunpack.c.l.b16 %v506
    %v1255 = vunpack.c.h.b16 %v506
    %v1256 = vunpack.c.l.b16 %v507
    %v1257 = vunpack.c.h.b16 %v507
    %v1258 = vunpack.c.l.b16 %v508
    %v1259 = vunpack.c.h.b16 %v508
    %v1260 = vunpack.c.l.b16 %v509
    %v1261 = vunpack.c.h.b16 %v509
    %v1262 = vunpack.c.l.b16 %v510
    %v1263 = vunpack.c.h.b16 %v510
    %v1264 = vunpack.c.l.b16 %v511
    %v1265 = vunpack.c.h.b16 %v511
    %v1266 = vunpack.c.l.b16 %v512
    %v1267 = vunpack.c.h.b16 %v512
    %v1268 = vunpack.c.l.b16 %v513
    %v1269 = vunpack.c.h.b16 %v513
    %v1270 = vunpack.c.l.b16 %v514
    %v1271 = vunpack.c.h.b16 %v514
    %v1272 = vunpack.c.l.b16 %v515
    %v1273 = vunpack.c.h.b16 %v515
    %v1274 = vunpack.c.l.b16 %v516
    %v1275 = vunpack.c.h.b16 %v516
    %v1276 = vunpack.c.l.b16 %v517
    %v1277 = vunpack.c.h.b16 %v517
    %v1278 = vunpack.c.l.b16 %v518
    %v1279 = vunpack.c.h.b16 %v518
    %v1280 = vunpack.c.l.b16 %v519
    %v1281 = vunpack.c.h.b16 %v519
    %v1282 = vunpack.c.l.b16 %v520
    %v1283 = vunpack.c.h.b16 %v520
    %v1284 = vunpack.c.l.b16 %v521
    %v1285 = vunpack.c.h.b16 %v521
    %v1286 = vunpack.c.l.b16 %v522
    %v1287 = vunpack.c.h.b16 %v522
    %v1288 = vunpack.c.l.b16 %v523
    %v1289 = vunpack.c.h.b16 %v523
    %v1290 = vunpack.c.l.b16 %v524
    %v1291 = vunpack.c.h.b16 %v524
    %v1292 = vunpack.c.l.b16 %v525
    %v1293 = vunpack.c.h.b16 %v525
    %v1294 = vunpack.c.l.b16 %v526
    %v1295 = vunpack.c.h.b16 %v526
    %v1296 = vunpack.c.l.b16 %v527
    %v1297 = vunpack.c.h.b16 %v527
    %v1298 = vunpack.c.l.b16 %v528
    %v1299 = vunpack.c.h.b16 %v528
    %v1300 = vunpack.c.l.b16 %v529
    %v1301 = vunpack.c.h.b16 %v529
    %v1302 = vunpack.c.l.b16 %v530
    %v1303 = vunpack.c.h.b16 %v530
    %v1304 = vunpack.c.l.b16 %v531
    %v1305 = vunpack.c.h.b16 %v531
    %v1306 = vunpack.c.l.b16 %v532
    %v1307 = vunpack.c.h.b16 %v532
    %v1308 = vunpack.c.l.b16 %v533
    %v1309 = vunpack.c.h.b16 %v533
    %v1310 = vunpack.c.l.b16 %v534
    %v1311 = vunpack.c.h.b16 %v534
    %v1312 = vunpack.c.l.b16 %v535
    %v1313 = vunpack.c.h.b16 %v535
    %v1314 = vunpack.c.l.b16 %v536
    %v1315 = vunpack.c.h.b16 %v536
    %v1316 = vunpack.c.l.b16 %v537
    %v1317 = vunpack.c.h.b16 %v537
    %v1318 = vunpack.c.l.b16 %v538
    %v1319 = vunpack.c.h.b16 %v538
    %v1320 = vunpack.c.l.b16 %v539
    %v1321 = vunpack.c.h.b16 %v539
    %v1322 = vunpack.c.l.b16 %v540
    %v1323 = vunpack.c.h.b16 %v540
    %v1324 = vunpack.c.l.b16 %v541
    %v1325 = vunpack.c.h.b16 %v541
    %v1326 = vunpack.c.l.b16 %v542
    %v1327 = vunpack.c.h.b16 %v542
    %v1328 = vunpack.c.l.b16 %v543
    %v1329 = vunpack.c.h.b16 %v543
    %v1330 = vunpack.c.l.b16 %v544
    %v1331 = vunpack.c.h.b16 %v544
    %v1332 = vunpack.c.l.b16 %v545
    %v1333 = vunpack.c.h.b16 %v545
    %v1334 = vunpack.c.l.b16 %v546
    %v1335 = vunpack.c.h.b16 %v546
    %v1336 = vunpack.c.l.b16 %v547
    %v1337 = vunpack.c.h.b16 %v547
    %v1338 = vunpack.c.l.b16 %v548
    %v1339 = vunpack.c.h.b16 %v548
    %v1340 = vunpack.c.l.b16 %v549
    %v1341 = vunpack.c.h.b16 %v549
    %v1342 = vunpack.c.l.b16 %v550
    %v1343 = vunpack.c.h.b16 %v550
    %v1344 = vunpack.c.l.b16 %v551
    %v1345 = vunpack.c.h.b16 %v551
    %v1346 = vunpack.c.l.b16 %v552
    %v1347 = vunpack.c.h.b16 %v552
    %v1348 = vunpack.c.l.b16 %v553
    %v1349 = vunpack.c.h.b16 %v553
    %v1350 = vunpack.c.l.b16 %v554
    %v1351 = vunpack.c.h.b16 %v554
    %v1352 = vunpack.c.l.b16 %v555
    %v1353 = vunpack.c.h.b16 %v555
    %v1354 = vunpack.c.l.b16 %v556
    %v1355 = vunpack.c.h.b16 %v556
    %v1356 = vunpack.c.l.b16 %v557
    %v1357 = vunpack.c.h.b16 %v557
    %v1358 = vunpack.c.l.b16 %v558
    %v1359 = vunpack.c.h.b16 %v558
    %v1360 = vunpack.c.l.b16 %v559
    %v1361 = vunpack.c.h.b16 %v559
    %v1362 = vunpack.c.l.b16 %v560
    %v1363 = vunpack.c.h.b16 %v560
    %v1364 = vunpack.c.l.b16 %v561
    %v1365 = vunpack.c.h.b16 %v561
    %v1366 = vunpack.c.l.b16 %v562
    %v1367 = vunpack.c.h.b16 %v562
    %v1368 = vunpack.c.l.b16 %v563
    %v1369 = vunpack.c.h.b16 %v563
    %v1370 = vunpack.c.l.b16 %v564
    %v1371 = vunpack.c.h.b16 %v564
    %v1372 = vunpack.c.l.b16 %v565
    %v1373 = vunpack.c.h.b16 %v565
    %v1374 = vunpack.c.l.b16 %v566
    %v1375 = vunpack.c.h.b16 %v566
    %v1376 = vunpack.c.l.b16 %v567
    %v1377 = vunpack.c.h.b16 %v567
    %v1378 = vunpack.c.l.b16 %v568
    %v1379 = vunpack.c.h.b16 %v568
    %v1380 = vunpack.c.l.b16 %v569
    %v1381 = vunpack.c.h.b16 %v569
    %v1382 = vunpack.c.l.b16 %v570
    %v1383 = vunpack.c.h.b16 %v570
    %v1384 = vunpack.c.l.b16 %v571
    %v1385 = vunpack.c.h.b16 %v571
    %v1386 = vunpack.c.l.b16 %v572
    %v1387 = vunpack.c.h.b16 %v572
    %v1388 = vunpack.c.l.b16 %v573
    %v1389 = vunpack.c.h.b16 %v573
    %v1390 = vunpack.c.l.b16 %v574
    %v1391 = vunpack.c.h.b16 %v574
    %v1392 = vunpack.c.l.b16 %v575
    %v1393 = vunpack.c.h.b16 %v575
    %v1394 = vunpack.c.l.b16 %v576
    %v1395 = vunpack.c.h.b16 %v576
    %v1396 = vunpack.c.l.b16 %v577
    %v1397 = vunpack.c.h.b16 %v577
    %v1398 = vunpack.c.l.b16 %v578
    %v1399 = vunpack.c.h.b16 %v578
    %v1400 = vunpack.c.l.b16 %v579
    %v1401 = vunpack.c.h.b16 %v579
    %v1402 = vunpack.c.l.b16 %v580
    %v1403 = vunpack.c.h.b16 %v580
    %v1404 = vunpack.c.l.b16 %v581
    %v1405 = vunpack.c.h.b16 %v581
    %v1406 = vunpack.c.l.b16 %v582
    %v1407 = vunpack.c.h.b16 %v582
    %v1408 = vunpack.c.l.b16 %v583
    %v1409 = vunpack.c.h.b16 %v583
    %v1410 = vunpack.c.l.b16 %v584
    %v1411 = vunpack.c.h.b16 %v584
    %v1412 = vunpack.c.l.b16 %v585
    %v1413 = vunpack.c.h.b16 %v585
    %v1414 = vunpack.c.l.b16 %v586
    %v1415 = vunpack.c.h.b16 %v586
    %v1416 = vunpack.c.l.b16 %v587
    %v1417 = vunpack.c.h.b16 %v587
    %v1418 = vunpack.c.l.b16 %v588
    %v1419 = vunpack.c.h.b16 %v588
    %v1420 = vunpack.c.l.b16 %v589
    %v1421 = vunpack.c.h.b16 %v589
    %v1422 = vunpack.c.l.b16 %v590
    %v1423 = vunpack.c.h.b16 %v590
    %v1424 = vunpack.c.l.b16 %v591
    %v1425 = vunpack.c.h.b16 %v591
    %v1426 = vunpack.c.l.b16 %v592
    %v1427 = vunpack.c.h.b16 %v592
    %v1428 = vunpack.c.l.b16 %v593
    %v1429 = vunpack.c.h.b16 %v593
    %v1430 = vunpack.c.l.b16 %v594
    %v1431 = vunpack.c.h.b16 %v594
    %v1432 = vunpack.c.l.b16 %v595
    %v1433 = vunpack.c.h.b16 %v595
    %v1434 = vunpack.c.l.b16 %v596
    %v1435 = vunpack.c.h.b16 %v596
    %v1436 = vunpack.c.l.b16 %v597
    %v1437 = vunpack.c.h.b16 %v597
    %v1438 = vunpack.c.l.b16 %v598
    %v1439 = vunpack.c.h.b16 %v598
    %v1440 = vunpack.c.l.b16 %v599
    %v1441 = vunpack.c.h.b16 %v599
    %v1442 = vunpack.c.l.b16 %v600
    %v1443 = vunpack.c.h.b16 %v600
    %v1444 = vunpack.c.l.b16 %v601
    %v1445 = vunpack.c.h.b16 %v601
    %v1446 = vunpack.c.l.b16 %v602
    %v1447 = vunpack.c.h.b16 %v602
    %v1448 = vunpack.c.l.b16 %v603
    %v1449 = vunpack.c.h.b16 %v603
    %v1450 = vunpack.c.l.b16 %v604
    %v1451 = vunpack.c.h.b16 %v604
    %v1452 = vunpack.c.l.b16 %v605
    %v1453 = vunpack.c.h.b16 %v605
    %v1454 = vunpack.c.l.b16 %v606
    %v1455 = vunpack.c.h.b16 %v606
    %v1456 = vunpack.c.l.b16 %v607
    %v1457 = vunpack.c.h.b16 %v607
    %v1458 = vunpack.c.l.b16 %v608
    %v1459 = vunpack.c.h.b16 %v608
    %v1460 = vunpack.c.l.b16 %v609
    %v1461 = vunpack.c.h.b16 %v609
    %v1462 = vunpack.c.l.b16 %v610
    %v1463 = vunpack.c.h.b16 %v610
    %v1464 = vunpack.c.l.b16 %v611
    %v1465 = vunpack.c.h.b16 %v611
    %v1466 = vunpack.c.l.b16 %v612
    %v1467 = vunpack.c.h.b16 %v612
    %v1468 = vunpack.c.l.b16 %v613
    %v1469 = vunpack.c.h.b16 %v613
    %v1470 = vunpack.c.l.b16 %v614
    %v1471 = vunpack.c.h.b16 %v614
    %v1472 = vunpack.c.l.b16 %v615
    %v1473 = vunpack.c.h.b16 %v615
    %v1474 = vunpack.c.l.b16 %v616
    %v1475 = vunpack.c.h.b16 %v616
    %v1476 = vunpack.c.l.b16 %v617
    %v1477 = vunpack.c.h.b16 %v617
    %v1478 = vunpack.c.l.b16 %v618
    %v1479 = vunpack.c.h.b16 %v618
    %v1480 = vunpack.c.l.b16 %v619
    %v1481 = vunpack.c.h.b16 %v619
    %v1482 = vunpack.c.l.b16 %v620
    %v1483 = vunpack.c.h.b16 %v620
    %v1484 = vunpack.c.l.b16 %v621
    %v1485 = vunpack.c.h.b16 %v621
    %v1486 = vunpack.c.l.b16 %v622
    %v1487 = vunpack.c.h.b16 %v622
    %v1488 = vunpack.c.l.b16 %v623
    %v1489 = vunpack.c.h.b16 %v623
    %v1490 = vunpack.c.l.b16 %v624
    %v1491 = vunpack.c.h.b16 %v624
    %v1492 = vunpack.c.l.b16 %v625
    %v1493 = vunpack.c.h.b16 %v625
    %v1494 = vunpack.c.l.b16 %v626
    %v1495 = vunpack.c.h.b16 %v626
    %v1496 = vunpack.c.l.b16 %v627
    %v1497 = vunpack.c.h.b16 %v627
    %v1498 = vunpack.c.l.b16 %v628
    %v1499 = vunpack.c.h.b16 %v628
    %v1500 = vunpack.c.l.b16 %v629
    %v1501 = vunpack.c.h.b16 %v629
    %v1502 = vunpack.c.l.b16 %v630
    %v1503 = vunpack.c.h.b16 %v630
    %v1504 = vunpack.c.l.b16 %v631
    %v1505 = vunpack.c.h.b16 %v631
    %v1506 = vunpack.c.l.b16 %v632
    %v1507 = vunpack.c.h.b16 %v632
    %v1508 = vunpack.c.l.b16 %v633
    %v1509 = vunpack.c.h.b16 %v633
    %v1510 = vunpack.c.l.b16 %v634
    %v1511 = vunpack.c.h.b16 %v634
    %v1512 = vunpack.c.l.b16 %v635
    %v1513 = vunpack.c.h.b16 %v635
    %v1514 = vunpack.c.l.b16 %v636
    %v1515 = vunpack.c.h.b16 %v636
    %v1516 = vunpack.c.l.b16 %v637
    %v1517 = vunpack.c.h.b16 %v637
    %v1518 = vunpack.c.l.b16 %v638
    %v1519 = vunpack.c.h.b16 %v638
    %v1520 = vunpack.c.l.b16 %v639
    %v1521 = vunpack.c.h.b16 %v639
    %v1522 = vunpack.c.l.b16 %v640
    %v1523 = vunpack.c.h.b16 %v640
    %v1524 = vunpack.c.l.b16 %v641
    %v1525 = vunpack.c.h.b16 %v641
    %v1526 = vunpack.c.l.b16 %v642
    %v1527 = vunpack.c.h.b16 %v642
    %v1528 = vunpack.c.l.b16 %v643
    %v1529 = vunpack.c.h.b16 %v643
    %v1530 = vunpack.c.l.b16 %v644
    %v1531 = vunpack.c.h.b16 %v644
    %v1532 = vunpack.c.l.b16 %v645
    %v1533 = vunpack.c.h.b16 %v645
    %v1534 = vunpack.c.l.b16 %v646
    %v1535 = vunpack.c.h.b16 %v646
    %v1536 = vunpack.c.l.b16 %v647
    %v1537 = vunpack.c.h.b16 %v647
    %v1538 = vunpack.c.l.b16 %v648
    %v1539 = vunpack.c.h.b16 %v648
    %v1540 = vunpack.c.l.b16 %v649
    %v1541 = vunpack.c.h.b16 %v649
    %v1542 = vunpack.c.l.b16 %v650
    %v1543 = vunpack.c.h.b16 %v650
    %v1544 = vunpack.c.l.b16 %v651
    %v1545 = vunpack.c.h.b16 %v651
    %v1546 = vunpack.c.l.b16 %v652
    %v1547 = vunpack.c.h.b16 %v652
    %v1548 = vunpack.c.l.b16 %v653
    %v1549 = vunpack.c.h.b16 %v653
    %v1550 = vunpack.c.l.b16 %v654
    %v1551 = vunpack.c.h.b16 %v654
    %v1552 = vunpack.c.l.b16 %v655
    %v1553 = vunpack.c.h.b16 %v655
    %v1554 = vunpack.c.l.b16 %v656
    %v1555 = vunpack.c.h.b16 %v656
    %v1556 = vunpack.c.l.b16 %v657
    %v1557 = vunpack.c.h.b16 %v657
    %v1558 = vunpack.c.l.b16 %v658
    %v1559 = vunpack.c.h.b16 %v658
    %v1560 = vunpack.c.l.b16 %v659
    %v1561 = vunpack.c.h.b16 %v659
    %v1562 = vunpack.c.l.b16 %v660
    %v1563 = vunpack.c.h.b16 %v660
    %v1564 = vunpack.c.l.b16 %v661
    %v1565 = vunpack.c.h.b16 %v661
    %v1566 = vunpack.c.l.b16 %v662
    %v1567 = vunpack.c.h.b16 %v662
    %v1568 = vunpack.c.l.b16 %v663
    %v1569 = vunpack.c.h.b16 %v663
    %v1570 = vpack.c.b16 %v1062, %v1058
    %v1571 = vpack.c.b16 %v1063, %v1059
    %v1572 = vpack.c.b16 %v1064, %v1060
    %v1573 = vpack.c.b16 %v1065, %v1061
    %v1574 = vpack.c.b16 %v1070, %v1066
    %v1575 = vpack.c.b16 %v1071, %v1067
    %v1576 = vpack.c.b16 %v1072, %v1068
    %v1577 = vpack.c.b16 %v1073, %v1069
    %v1578 = vpack.c.b16 %v1078, %v1074
    %v1579 = vpack.c.b16 %v1079, %v1075
    %v1580 = vpack.c.b16 %v1080, %v1076
    %v1581 = vpack.c.b16 %v1081, %v1077
    %v1582 = vpack.c.b16 %v1086, %v1082
    %v1583 = vpack.c.b16 %v1087, %v1083
    %v1584 = vpack.c.b16 %v1088, %v1084
    %v1585 = vpack.c.b16 %v1089, %v1085
    %v1586 = vpack.c.b16 %v1094, %v1090
    %v1587 = vpack.c.b16 %v1095, %v1091
    %v1588 = vpack.c.b16 %v1096, %v1092
    %v1589 = vpack.c.b16 %v1097, %v1093
    %v1590 = vpack.c.b16 %v1102, %v1098
    %v1591 = vpack.c.b16 %v1103, %v1099
    %v1592 = vpack.c.b16 %v1104, %v1100
    %v1593 = vpack.c.b16 %v1105, %v1101
    %v1594 = vpack.c.b16 %v1110, %v1106
    %v1595 = vpack.c.b16 %v1111, %v1107
    %v1596 = vpack.c.b16 %v1112, %v1108
    %v1597 = vpack.c.b16 %v1113, %v1109
    %v1598 = vpack.c.b16 %v1118, %v1114
    %v1599 = vpack.c.b16 %v1119, %v1115
    %v1600 = vpack.c.b16 %v1120, %v1116
    %v1601 = vpack.c.b16 %v1121, %v1117
    %v1602 = vpack.c.b16 %v1126, %v1122
    %v1603 = vpack.c.b16 %v1127, %v1123
    %v1604 = vpack.c.b16 %v1128, %v1124
    %v1605 = vpack.c.b16 %v1129, %v1125
    %v1606 = vpack.c.b16 %v1134, %v1130
    %v1607 = vpack.c.b16 %v1135, %v1131
    %v1608 = vpack.c.b16 %v1136, %v1132
    %v1609 = vpack.c.b16 %v1137, %v1133
    %v1610 = vpack.c.b16 %v1142, %v1138
    %v1611 = vpack.c.b16 %v1143, %v1139
    %v1612 = vpack.c.b16 %v1144, %v1140
    %v1613 = vpack.c.b16 %v1145, %v1141
    %v1614 = vpack.c.b16 %v1150, %v1146
    %v1615 = vpack.c.b16 %v1151, %v1147
    %v1616 = vpack.c.b16 %v1152, %v1148
    %v1617 = vpack.c.b16 %v1153, %v1149
    %v1618 = vpack.c.b16 %v1158, %v1154
    %v1619 = vpack.c.b16 %v1159, %v1155
    %v1620 = vpack.c.b16 %v1160, %v1156
    %v1621 = vpack.c.b16 %v1161, %v1157
    %v1622 = vpack.c.b16 %v1166, %v1162
    %v1623 = vpack.c.b16 %v1167, %v1163
    %v1624 = vpack.c.b16 %v1168, %v1164
    %v1625 = vpack.c.b16 %v1169, %v1165
    %v1626 = vpack.c.b16 %v1174, %v1170
    %v1627 = vpack.c.b16 %v1175, %v1171
    %v1628 = vpack.c.b16 %v1176, %v1172
    %v1629 = vpack.c.b16 %v1177, %v1173
    %v1630 = vpack.c.b16 %v1182, %v1178
    %v1631 = vpack.c.b16 %v1183, %v1179
    %v1632 = vpack.c.b16 %v1184, %v1180
    %v1633 = vpack.c.b16 %v1185, %v1181
    %v1634 = vpack.c.b16 %v1190, %v1186
    %v1635 = vpack.c.b16 %v1191, %v1187
    %v1636 = vpack.c.b16 %v1192, %v1188
    %v1637 = vpack.c.b16 %v1193, %v1189
    %v1638 = vpack.c.b16 %v1198, %v1194
    %v1639 = vpack.c.b16 %v1199, %v1195
    %v1640 = vpack.c.b16 %v1200, %v1196
    %v1641 = vpack.c.b16 %v1201, %v1197
    %v1642 = vpack.c.b16 %v1206, %v1202
    %v1643 = vpack.c.b16 %v1207, %v1203
    %v1644 = vpack.c.b16 %v1208, %v1204
    %v1645 = vpack.c.b16 %v1209, %v1205
    %v1646 = vpack.c.b16 %v1214, %v1210
    %v1647 = vpack.c.b16 %v1215, %v1211
    %v1648 = vpack.c.b16 %v1216, %v1212
    %v1649 = vpack.c.b16 %v1217, %v1213
    %v1650 = vpack.c.b16 %v1222, %v1218
    %v1651 = vpack.c.b16 %v1223, %v1219
    %v1652 = vpack.c.b16 %v1224, %v1220
    %v1653 = vpack.c.b16 %v1225, %v1221
    %v1654 = vpack.c.b16 %v1230, %v1226
    %v1655 = vpack.c.b16 %v1231, %v1227
    %v1656 = vpack.c.b16 %v1232, %v1228
    %v1657 = vpack.c.b16 %v1233, %v1229
    %v1658 = vpack.c.b16 %v1238, %v1234
    %v1659 = vpack.c.b16 %v1239, %v1235
    %v1660 = vpack.c.b16 %v1240, %v1236
    %v1661 = vpack.c.b16 %v1241, %v1237
    %v1662 = vpack.c.b16 %v1246, %v1242
    %v1663 = vpack.c.b16 %v1247, %v1243
    %v1664 = vpack.c.b16 %v1248, %v1244
    %v1665 = vpack.c.b16 %v1249, %v1245
    %v1666 = vpack.c.b16 %v1254, %v1250
    %v1667 = vpack.c.b16 %v1255, %v1251
    %v1668 = vpack.c.b16 %v1256, %v1252
    %v1669 = vpack.c.b16 %v1257, %v1253
    %v1670 = vpack.c.b16 %v1262, %v1258
    %v1671 = vpack.c.b16 %v1263, %v1259
    %v1672 = vpack.c.b16 %v1264, %v1260
    %v1673 = vpack.c.b16 %v1265, %v1261
    %v1674 = vpack.c.b16 %v1270, %v1266
    %v1675 = vpack.c.b16 %v1271, %v1267
    %v1676 = vpack.c.b16 %v1272, %v1268
    %v1677 = vpack.c.b16 %v1273, %v1269
    %v1678 = vpack.c.b16 %v1278, %v1274
    %v1679 = vpack.c.b16 %v1279, %v1275
    %v1680 = vpack.c.b16 %v1280, %v1276
    %v1681 = vpack.c.b16 %v1281, %v1277
    %v1682 = vpack.c.b16 %v1286, %v1282
    %v1683 = vpack.c.b16 %v1287, %v1283
    %v1684 = vpack.c.b16 %v1288, %v1284
    %v1685 = vpack.c.b16 %v1289, %v1285
    %v1686 = vpack.c.b16 %v1294, %v1290
    %v1687 = vpack.c.b16 %v1295, %v1291
    %v1688 = vpack.c.b16 %v1296, %v1292
    %v1689 = vpack.c.b16 %v1297, %v1293
    %v1690 = vpack.c.b16 %v1302, %v1298
    %v1691 = vpack.c.b16 %v1303, %v1299
    %v1692 = vpack.c.b16 %v1304, %v1300
    %v1693 = vpack.c.b16 %v1305, %v1301
    %v1694 = vpack.c.b16 %v1310, %v1306
    %v1695 = vpack.c.b16 %v1311, %v1307
    %v1696 = vpack.c.b16 %v1312, %v1308
    %v1697 = vpack.c.b16 %v1313, %v1309
    %v1698 = vpack.c.b16 %v1318, %v1314
    %v1699 = vpack.c.b16 %v1319, %v1315
    %v1700 = vpack.c.b16 %v1320, %v1316
    %v1701 = vpack.c.b16 %v1321, %v1317
    %v1702 = vpack.c.b16 %v1326, %v1322
    %v1703 = vpack.c.b16 %v1327, %v1323
    %v1704 = vpack.c.b16 %v1328, %v1324
    %v1705 = vpack.c.b16 %v1329, %v1325
    %v1706 = vpack.c.b16 %v1334, %v1330
    %v1707 = vpack.c.b16 %v1335, %v1331
    %v1708 = vpack.c.b16 %v1336, %v1332
    %v1709 = vpack.c.b16 %v1337, %v1333
    %v1710 = vpack.c.b16 %v1342, %v1338
    %v1711 = vpack.c.b16 %v1343, %v1339
    %v1712 = vpack.c.b16 %v1344, %v1340
    %v1713 = vpack.c.b16 %v1345, %v1341
    %v1714 = vpack.c.b16 %v1350, %v1346
    %v1715 = vpack.c.b16 %v1351, %v1347
    %v1716 = vpack.c.b16 %v1352, %v1348
    %v1717 = vpack.c.b16 %v1353, %v1349
    %v1718 = vpack.c.b16 %v1358, %v1354
    %v1719 = vpack.c.b16 %v1359, %v1355
    %v1720 = vpack.c.b16 %v1360, %v1356
    %v1721 = vpack.c.b16 %v1361, %v1357
    %v1722 = vpack.c.b16 %v1366, %v1362
    %v1723 = vpack.c.b16 %v1367, %v1363
    %v1724 = vpack.c.b16 %v1368, %v1364
    %v1725 = vpack.c.b16 %v1369, %v1365
    %v1726 = vpack.c.b16 %v1374, %v1370
    %v1727 = vpack.c.b16 %v1375, %v1371
    %v1728 = vpack.c.b16 %v1376, %v1372
    %v1729 = vpack.c.b16 %v1377, %v1373
    %v1730 = vpack.c.b16 %v1382, %v1378
    %v1731 = vpack.c.b16 %v1383, %v1379
    %v1732 = vpack.c.b16 %v1384, %v1380
    %v1733 = vpack.c.b16 %v1385, %v1381
    %v1734 = vpack.c.b16 %v1390, %v1386
    %v1735 = vpack.c.b16 %v1391, %v1387
    %v1736 = vpack.c.b16 %v1392, %v1388
    %v1737 = vpack.c.b16 %v1393, %v1389
    %v1738 = vpack.c.b16 %v1398, %v1394
    %v1739 = vpack.c.b16 %v1399, %v1395
    %v1740 = vpack.c.b16 %v1400, %v1396
    %v1741 = vpack.c.b16 %v1401, %v1397
    %v1742 = vpack.c.b16 %v1406, %v1402
    %v1743 = vpack.c.b16 %v1407, %v1403
    %v1744 = vpack.c.b16 %v1408, %v1404
    %v1745 = vpack.c.b16 %v1409, %v1405
    %v1746 = vpack.c.b16 %v1414, %v1410
    %v1747 = vpack.c.b16 %v1415, %v1411
    %v1748 = vpack.c.b16 %v1416, %v1412
    %v1749 = vpack.c.b16 %v1417, %v1413
    %v1750 = vpack.c.b16 %v1422, %v1418
    %v1751 = vpack.c.b16 %v1423, %v1419
    %v1752 = vpack.c.b16 %v1424, %v1420
    %v1753 = vpack.c.b16 %v1425, %v1421
    %v1754 = vpack.c.b16 %v1430, %v1426
    %v1755 = vpack.c.b16 %v1431, %v1427
    %v1756 = vpack.c.b16 %v1432, %v1428
    %v1757 = vpack.c.b16 %v1433, %v1429
    %v1758 = vpack.c.b16 %v1438, %v1434
    %v1759 = vpack.c.b16 %v1439, %v1435
    %v1760 = vpack.c.b16 %v1440, %v1436
    %v1761 = vpack.c.b16 %v1441, %v1437
    %v1762 = vpack.c.b16 %v1446, %v1442
    %v1763 = vpack.c.b16 %v1447, %v1443
    %v1764 = vpack.c.b16 %v1448, %v1444
    %v1765 = vpack.c.b16 %v1449, %v1445
    %v1766 = vpack.c.b16 %v1454, %v1450
    %v1767 = vpack.c.b16 %v1455, %v1451
    %v1768 = vpack.c.b16 %v1456, %v1452
    %v1769 = vpack.c.b16 %v1457, %v1453
    %v1770 = vpack.c.b16 %v1462, %v1458
    %v1771 = vpack.c.b16 %v1463, %v1459
    %v1772 = vpack.c.b16 %v1464, %v1460
    %v1773 = vpack.c.b16 %v1465, %v1461
    %v1774 = vpack.c.b16 %v1470, %v1466
    %v1775 = vpack.c.b16 %v1471, %v1467
    %v1776 = vpack.c.b16 %v1472, %v1468
    %v1777 = vpack.c.b16 %v1473, %v1469
    %v1778 = vpack.c.b16 %v1478, %v1474
    %v1779 = vpack.c.b16 %v1479, %v1475
    %v1780 = vpack.c.b16 %v1480, %v1476
    %v1781 = vpack.c.b16 %v1481, %v1477
    %v1782 = vpack.c.b16 %v1486, %v1482
    %v1783 = vpack.c.b16 %v1487, %v1483
    %v1784 = vpack.c.b16 %v1488, %v1484
    %v1785 = vpack.c.b16 %v1489, %v1485
    %v1786 = vpack.c.b16 %v1494, %v1490
    %v1787 = vpack.c.b16 %v1495, %v1491
    %v1788 = vpack.c.b16 %v1496, %v1492
    %v1789 = vpack.c.b16 %v1497, %v1493
    %v1790 = vpack.c.b16 %v1502, %v1498
    %v1791 = vpack.c.b16 %v1503, %v1499
    %v1792 = vpack.c.b16 %v1504, %v1500
    %v1793 = vpack.c.b16 %v1505, %v1501
    %v1794 = vpack.c.b16 %v1510, %v1506
    %v1795 = vpack.c.b16 %v1511, %v1507
    %v1796 = vpack.c.b16 %v1512, %v1508
    %v1797 = vpack.c.b16 %v1513, %v1509
    %v1798 = vpack.c.b16 %v1518, %v1514
    %v1799 = vpack.c.b16 %v1519, %v1515
    %v1800 = vpack.c.b16 %v1520, %v1516
    %v1801 = vpack.c.b16 %v1521, %v1517
    %v1802 = vpack.c.b16 %v1526, %v1522
    %v1803 = vpack.c.b16 %v1527, %v1523
    %v1804 = vpack.c.b16 %v1528, %v1524
    %v1805 = vpack.c.b16 %v1529, %v1525
    %v1806 = vpack.c.b16 %v1534, %v1530
    %v1807 = vpack.c.b16 %v1535, %v1531
    %v1808 = vpack.c.b16 %v1536, %v1532
    %v1809 = vpack.c.b16 %v1537, %v1533
    %v1810 = vpack.c.b16 %v1542, %v1538
    %v1811 = vpack.c.b16 %v1543, %v1539
    %v1812 = vpack.c.b16 %v1544, %v1540
    %v1813 = vpack.c.b16 %v1545, %v1541
    %v1814 = vpack.c.b16 %v1550, %v1546
    %v1815 = vpack.c.b16 %v1551, %v1547
    %v1816 = vpack.c.b16 %v1552, %v1548
    %v1817 = vpack.c.b16 %v1553, %v1549
    %v1818 = vpack.c.b16 %v1558, %v1554
    %v1819 = vpack.c.b16 %v1559, %v1555
    %v1820 = vpack.c.b16 %v1560, %v1556
    %v1821 = vpack.c.b16 %v1561, %v1557
    %v1822 = vpack.c.b16 %v1566, %v1562
    %v1823 = vpack.c.b16 %v1567, %v1563
    %v1824 = vpack.c.b16 %v1568, %v1564
    %v1825 = vpack.c.b16 %v1569, %v1565
    %2082 = vmatprep.subr.bf16.mxu0 %v1571
    %2083 = vmatpush1.bf16.msra.mxu0 %v1570
    %2084 = vmatprep.subr.bf16.mxu0 %v1575
    %2085 = vmatpush1.bf16.msra.mxu0 %v1574
    %2086 = vmatprep.subr.bf16.mxu0 %v1579
    %2087 = vmatpush1.bf16.msra.mxu0 %v1578
    %2088 = vmatprep.subr.bf16.mxu0 %v1583
    %2089 = vmatpush1.bf16.msra.mxu0 %v1582
    %2090 = vmatprep.subr.bf16.mxu0 %v1587
    %2091 = vmatpush1.bf16.msra.mxu0 %v1586
    %2092 = vmatprep.subr.bf16.mxu0 %v1591
    %2093 = vmatpush1.bf16.msra.mxu0 %v1590
    %2094 = vmatprep.subr.bf16.mxu0 %v1595
    %2095 = vmatpush1.bf16.msra.mxu0 %v1594
    %2096 = vmatprep.subr.bf16.mxu0 %v1599
    %2097 = vmatpush1.bf16.msra.mxu0 %v1598
    %2098 = vmatprep.subr.bf16.mxu0 %v1603
    %2099 = vmatpush1.bf16.msra.mxu0 %v1602
    %2100 = vmatprep.subr.bf16.mxu0 %v1607
    %2101 = vmatpush1.bf16.msra.mxu0 %v1606
    %2102 = vmatprep.subr.bf16.mxu0 %v1611
    %2103 = vmatpush1.bf16.msra.mxu0 %v1610
    %2104 = vmatprep.subr.bf16.mxu0 %v1615
    %2105 = vmatpush1.bf16.msra.mxu0 %v1614
    %2106 = vmatprep.subr.bf16.mxu0 %v1619
    %2107 = vmatpush1.bf16.msra.mxu0 %v1618
    %2108 = vmatprep.subr.bf16.mxu0 %v1623
    %2109 = vmatpush1.bf16.msra.mxu0 %v1622
    %2110 = vmatprep.subr.bf16.mxu0 %v1627
    %2111 = vmatpush1.bf16.msra.mxu0 %v1626
    %2112 = vmatprep.subr.bf16.mxu0 %v1631
    %2113 = vmatpush1.bf16.msra.mxu0 %v1630
    %2114 = vmatprep.mubr.bf16.mxu0 %v401
    %2115 = vmatmul.mubr.bf16.gmra.mrb[0].mxu0 %v400
    %v2116 = vpop.f32.mrb[0].mxu0
    %v2117 = vadd.f32 %v755, %v2116
    %v2118 = vpop.f32.mrb[0].mxu0
    %v2119 = vadd.f32 %v757, %v2118
    %v2120 = vpop.f32.mrb[0].mxu0
    %v2121 = vpop.f32.mrb[0].mxu0
    %2122 = vdwg.mxu0
    %2123 = vmatprep.subr.bf16.mxu0 %v1635
    %2124 = vmatpush1.bf16.msra.mxu0 %v1634
    %2125 = vmatprep.subr.bf16.mxu0 %v1639
    %2126 = vmatpush1.bf16.msra.mxu0 %v1638
    %2127 = vmatprep.subr.bf16.mxu0 %v1643
    %2128 = vmatpush1.bf16.msra.mxu0 %v1642
    %2129 = vmatprep.subr.bf16.mxu0 %v1647
    %2130 = vmatpush1.bf16.msra.mxu0 %v1646
    %2131 = vmatprep.subr.bf16.mxu0 %v1651
    %2132 = vmatpush1.bf16.msra.mxu0 %v1650
    %2133 = vmatprep.subr.bf16.mxu0 %v1655
    %2134 = vmatpush1.bf16.msra.mxu0 %v1654
    %2135 = vmatprep.subr.bf16.mxu0 %v1659
    %2136 = vmatpush1.bf16.msra.mxu0 %v1658
    %2137 = vmatprep.subr.bf16.mxu0 %v1663
    %2138 = vmatpush1.bf16.msra.mxu0 %v1662
    %2139 = vmatprep.subr.bf16.mxu0 %v1667
    %2140 = vmatpush1.bf16.msra.mxu0 %v1666
    %2141 = vmatprep.subr.bf16.mxu0 %v1671
    %2142 = vmatpush1.bf16.msra.mxu0 %v1670
    %2143 = vmatprep.subr.bf16.mxu0 %v1675
    %2144 = vmatpush1.bf16.msra.mxu0 %v1674
    %2145 = vmatprep.subr.bf16.mxu0 %v1679
    %2146 = vmatpush1.bf16.msra.mxu0 %v1678
    %2147 = vmatprep.subr.bf16.mxu0 %v1683
    %2148 = vmatpush1.bf16.msra.mxu0 %v1682
    %2149 = vmatprep.subr.bf16.mxu0 %v1687
    %2150 = vmatpush1.bf16.msra.mxu0 %v1686
    %2151 = vmatprep.subr.bf16.mxu0 %v1691
    %2152 = vmatpush1.bf16.msra.mxu0 %v1690
    %2153 = vmatprep.subr.bf16.mxu0 %v1695
    %2154 = vmatpush1.bf16.msra.mxu0 %v1694
    %2155 = vmatprep.mubr.bf16.mxu0 %v403
    %2156 = vmatmul.mubr.bf16.gmra.mrb[0].mxu0 %v402
    %v2157 = vpop.f32.mrb[0].mxu0
    %v2158 = vadd.f32 %v2117, %v2157
    %v2159 = vpop.f32.mrb[0].mxu0
    %v2160 = vadd.f32 %v2119, %v2159
    %v2161 = vpop.f32.mrb[0].mxu0
    %v2162 = vpop.f32.mrb[0].mxu0
    %2163 = vdwg.mxu0
    %2164 = vmatprep.subr.bf16.mxu0 %v1699
    %2165 = vmatpush1.bf16.msra.mxu0 %v1698
    %2166 = vmatprep.subr.bf16.mxu0 %v1703
    %2167 = vmatpush1.bf16.msra.mxu0 %v1702
    %2168 = vmatprep.subr.bf16.mxu0 %v1707
    %2169 = vmatpush1.bf16.msra.mxu0 %v1706
    %2170 = vmatprep.subr.bf16.mxu0 %v1711
    %2171 = vmatpush1.bf16.msra.mxu0 %v1710
    %2172 = vmatprep.subr.bf16.mxu0 %v1715
    %2173 = vmatpush1.bf16.msra.mxu0 %v1714
    %2174 = vmatprep.subr.bf16.mxu0 %v1719
    %2175 = vmatpush1.bf16.msra.mxu0 %v1718
    %2176 = vmatprep.subr.bf16.mxu0 %v1723
    %2177 = vmatpush1.bf16.msra.mxu0 %v1722
    %2178 = vmatprep.subr.bf16.mxu0 %v1727
    %2179 = vmatpush1.bf16.msra.mxu0 %v1726
    %2180 = vmatprep.subr.bf16.mxu0 %v1731
    %2181 = vmatpush1.bf16.msra.mxu0 %v1730
    %2182 = vmatprep.subr.bf16.mxu0 %v1735
    %2183 = vmatpush1.bf16.msra.mxu0 %v1734
    %2184 = vmatprep.subr.bf16.mxu0 %v1739
    %2185 = vmatpush1.bf16.msra.mxu0 %v1738
    %2186 = vmatprep.subr.bf16.mxu0 %v1743
    %2187 = vmatpush1.bf16.msra.mxu0 %v1742
    %2188 = vmatprep.subr.bf16.mxu0 %v1747
    %2189 = vmatpush1.bf16.msra.mxu0 %v1746
    %2190 = vmatprep.subr.bf16.mxu0 %v1751
    %2191 = vmatpush1.bf16.msra.mxu0 %v1750
    %2192 = vmatprep.subr.bf16.mxu0 %v1755
    %2193 = vmatpush1.bf16.msra.mxu0 %v1754
    %2194 = vmatprep.subr.bf16.mxu0 %v1759
    %2195 = vmatpush1.bf16.msra.mxu0 %v1758
    %2196 = vmatprep.mubr.bf16.mxu0 %v405
    %2197 = vmatmul.mubr.bf16.gmra.mrb[0].mxu0 %v404
    %v2198 = vpop.f32.mrb[0].mxu0
    %v2199 = vadd.f32 %v2158, %v2198
    %v2200 = vpop.f32.mrb[0].mxu0
    %v2201 = vadd.f32 %v2160, %v2200
    %v2202 = vpop.f32.mrb[0].mxu0
    %v2203 = vpop.f32.mrb[0].mxu0
    %2204 = vdwg.mxu0
    %2205 = vmatprep.subr.bf16.mxu0 %v1763
    %2206 = vmatpush1.bf16.msra.mxu0 %v1762
    %2207 = vmatprep.subr.bf16.mxu0 %v1767
    %2208 = vmatpush1.bf16.msra.mxu0 %v1766
    %2209 = vmatprep.subr.bf16.mxu0 %v1771
    %2210 = vmatpush1.bf16.msra.mxu0 %v1770
    %2211 = vmatprep.subr.bf16.mxu0 %v1775
    %2212 = vmatpush1.bf16.msra.mxu0 %v1774
    %2213 = vmatprep.subr.bf16.mxu0 %v1779
    %2214 = vmatpush1.bf16.msra.mxu0 %v1778
    %2215 = vmatprep.subr.bf16.mxu0 %v1783
    %2216 = vmatpush1.bf16.msra.mxu0 %v1782
    %2217 = vmatprep.subr.bf16.mxu0 %v1787
    %2218 = vmatpush1.bf16.msra.mxu0 %v1786
    %2219 = vmatprep.subr.bf16.mxu0 %v1791
    %2220 = vmatpush1.bf16.msra.mxu0 %v1790
    %2221 = vmatprep.subr.bf16.mxu0 %v1795
    %2222 = vmatpush1.bf16.msra.mxu0 %v1794
    %2223 = vmatprep.subr.bf16.mxu0 %v1799
    %2224 = vmatpush1.bf16.msra.mxu0 %v1798
    %2225 = vmatprep.subr.bf16.mxu0 %v1803
    %2226 = vmatpush1.bf16.msra.mxu0 %v1802
    %2227 = vmatprep.subr.bf16.mxu0 %v1807
    %2228 = vmatpush1.bf16.msra.mxu0 %v1806
    %2229 = vmatprep.subr.bf16.mxu0 %v1811
    %2230 = vmatpush1.bf16.msra.mxu0 %v1810
    %2231 = vmatprep.subr.bf16.mxu0 %v1815
    %2232 = vmatpush1.bf16.msra.mxu0 %v1814
    %2233 = vmatprep.subr.bf16.mxu0 %v1819
    %2234 = vmatpush1.bf16.msra.mxu0 %v1818
    %2235 = vmatprep.subr.bf16.mxu0 %v1823
    %2236 = vmatpush1.bf16.msra.mxu0 %v1822
    %2237 = vmatprep.mubr.bf16.mxu0 %v407
    %2238 = vmatmul.mubr.bf16.gmra.mrb[0].mxu0 %v406
    %v2239 = vpop.f32.mrb[0].mxu0
    %v2240 = vadd.f32 %v2199, %v2239
    %v2241 = vpop.f32.mrb[0].mxu0
    %v2242 = vadd.f32 %v2201, %v2241
    %v2243 = vpop.f32.mrb[0].mxu0
    %v2244 = vpop.f32.mrb[0].mxu0
    %2245 = vdwg.mxu0
    %2246 = vmatprep.subr.bf16.mxu0 %v1573
    %2247 = vmatpush1.bf16.msra.mxu0 %v1572
    %2248 = vmatprep.subr.bf16.mxu0 %v1577
    %2249 = vmatpush1.bf16.msra.mxu0 %v1576
    %2250 = vmatprep.subr.bf16.mxu0 %v1581
    %2251 = vmatpush1.bf16.msra.mxu0 %v1580
    %2252 = vmatprep.subr.bf16.mxu0 %v1585
    %2253 = vmatpush1.bf16.msra.mxu0 %v1584
    %2254 = vmatprep.subr.bf16.mxu0 %v1589
    %2255 = vmatpush1.bf16.msra.mxu0 %v1588
    %2256 = vmatprep.subr.bf16.mxu0 %v1593
    %2257 = vmatpush1.bf16.msra.mxu0 %v1592
    %2258 = vmatprep.subr.bf16.mxu0 %v1597
    %2259 = vmatpush1.bf16.msra.mxu0 %v1596
    %2260 = vmatprep.subr.bf16.mxu0 %v1601
    %2261 = vmatpush1.bf16.msra.mxu0 %v1600
    %2262 = vmatprep.subr.bf16.mxu0 %v1605
    %2263 = vmatpush1.bf16.msra.mxu0 %v1604
    %2264 = vmatprep.subr.bf16.mxu0 %v1609
    %2265 = vmatpush1.bf16.msra.mxu0 %v1608
    %2266 = vmatprep.subr.bf16.mxu0 %v1613
    %2267 = vmatpush1.bf16.msra.mxu0 %v1612
    %2268 = vmatprep.subr.bf16.mxu0 %v1617
    %2269 = vmatpush1.bf16.msra.mxu0 %v1616
    %2270 = vmatprep.subr.bf16.mxu0 %v1621
    %2271 = vmatpush1.bf16.msra.mxu0 %v1620
    %2272 = vmatprep.subr.bf16.mxu0 %v1625
    %2273 = vmatpush1.bf16.msra.mxu0 %v1624
    %2274 = vmatprep.subr.bf16.mxu0 %v1629
    %2275 = vmatpush1.bf16.msra.mxu0 %v1628
    %2276 = vmatprep.subr.bf16.mxu0 %v1633
    %2277 = vmatpush1.bf16.msra.mxu0 %v1632
    %2278 = vmatprep.mubr.bf16.mxu0 %v401
    %2279 = vmatmul.mubr.bf16.gmra.mrb[0].mxu0 %v400
    %v2280 = vpop.f32.mrb[0].mxu0
    %v2281 = vadd.f32 %v796, %v2280
    %v2282 = vpop.f32.mrb[0].mxu0
    %v2283 = vadd.f32 %v798, %v2282
    %v2284 = vpop.f32.mrb[0].mxu0
    %v2285 = vpop.f32.mrb[0].mxu0
    %2286 = vdwg.mxu0
    %2287 = vmatprep.subr.bf16.mxu0 %v1637
    %2288 = vmatpush1.bf16.msra.mxu0 %v1636
    %2289 = vmatprep.subr.bf16.mxu0 %v1641
    %2290 = vmatpush1.bf16.msra.mxu0 %v1640
    %2291 = vmatprep.subr.bf16.mxu0 %v1645
    %2292 = vmatpush1.bf16.msra.mxu0 %v1644
    %2293 = vmatprep.subr.bf16.mxu0 %v1649
    %2294 = vmatpush1.bf16.msra.mxu0 %v1648
    %2295 = vmatprep.subr.bf16.mxu0 %v1653
    %2296 = vmatpush1.bf16.msra.mxu0 %v1652
    %2297 = vmatprep.subr.bf16.mxu0 %v1657
    %2298 = vmatpush1.bf16.msra.mxu0 %v1656
    %2299 = vmatprep.subr.bf16.mxu0 %v1661
    %2300 = vmatpush1.bf16.msra.mxu0 %v1660
    %2301 = vmatprep.subr.bf16.mxu0 %v1665
    %2302 = vmatpush1.bf16.msra.mxu0 %v1664
    %2303 = vmatprep.subr.bf16.mxu0 %v1669
    %2304 = vmatpush1.bf16.msra.mxu0 %v1668
    %2305 = vmatprep.subr.bf16.mxu0 %v1673
    %2306 = vmatpush1.bf16.msra.mxu0 %v1672
    %2307 = vmatprep.subr.bf16.mxu0 %v1677
    %2308 = vmatpush1.bf16.msra.mxu0 %v1676
    %2309 = vmatprep.subr.bf16.mxu0 %v1681
    %2310 = vmatpush1.bf16.msra.mxu0 %v1680
    %2311 = vmatprep.subr.bf16.mxu0 %v1685
    %2312 = vmatpush1.bf16.msra.mxu0 %v1684
    %2313 = vmatprep.subr.bf16.mxu0 %v1689
    %2314 = vmatpush1.bf16.msra.mxu0 %v1688
    %2315 = vmatprep.subr.bf16.mxu0 %v1693
    %2316 = vmatpush1.bf16.msra.mxu0 %v1692
    %2317 = vmatprep.subr.bf16.mxu0 %v1697
    %2318 = vmatpush1.bf16.msra.mxu0 %v1696
    %2319 = vmatprep.mubr.bf16.mxu0 %v403
    %2320 = vmatmul.mubr.bf16.gmra.mrb[0].mxu0 %v402
    %v2321 = vpop.f32.mrb[0].mxu0
    %v2322 = vadd.f32 %v2281, %v2321
    %v2323 = vpop.f32.mrb[0].mxu0
    %v2324 = vadd.f32 %v2283, %v2323
    %v2325 = vpop.f32.mrb[0].mxu0
    %v2326 = vpop.f32.mrb[0].mxu0
    %2327 = vdwg.mxu0
    %2328 = vmatprep.subr.bf16.mxu0 %v1701
    %2329 = vmatpush1.bf16.msra.mxu0 %v1700
    %2330 = vmatprep.subr.bf16.mxu0 %v1705
    %2331 = vmatpush1.bf16.msra.mxu0 %v1704
    %2332 = vmatprep.subr.bf16.mxu0 %v1709
    %2333 = vmatpush1.bf16.msra.mxu0 %v1708
    %2334 = vmatprep.subr.bf16.mxu0 %v1713
    %2335 = vmatpush1.bf16.msra.mxu0 %v1712
    %2336 = vmatprep.subr.bf16.mxu0 %v1717
    %2337 = vmatpush1.bf16.msra.mxu0 %v1716
    %2338 = vmatprep.subr.bf16.mxu0 %v1721
    %2339 = vmatpush1.bf16.msra.mxu0 %v1720
    %2340 = vmatprep.subr.bf16.mxu0 %v1725
    %2341 = vmatpush1.bf16.msra.mxu0 %v1724
    %2342 = vmatprep.subr.bf16.mxu0 %v1729
    %2343 = vmatpush1.bf16.msra.mxu0 %v1728
    %2344 = vmatprep.subr.bf16.mxu0 %v1733
    %2345 = vmatpush1.bf16.msra.mxu0 %v1732
    %2346 = vmatprep.subr.bf16.mxu0 %v1737
    %2347 = vmatpush1.bf16.msra.mxu0 %v1736
    %2348 = vmatprep.subr.bf16.mxu0 %v1741
    %2349 = vmatpush1.bf16.msra.mxu0 %v1740
    %2350 = vmatprep.subr.bf16.mxu0 %v1745
    %2351 = vmatpush1.bf16.msra.mxu0 %v1744
    %2352 = vmatprep.subr.bf16.mxu0 %v1749
    %2353 = vmatpush1.bf16.msra.mxu0 %v1748
    %2354 = vmatprep.subr.bf16.mxu0 %v1753
    %2355 = vmatpush1.bf16.msra.mxu0 %v1752
    %2356 = vmatprep.subr.bf16.mxu0 %v1757
    %2357 = vmatpush1.bf16.msra.mxu0 %v1756
    %2358 = vmatprep.subr.bf16.mxu0 %v1761
    %2359 = vmatpush1.bf16.msra.mxu0 %v1760
    %2360 = vmatprep.mubr.bf16.mxu0 %v405
    %2361 = vmatmul.mubr.bf16.gmra.mrb[0].mxu0 %v404
    %v2362 = vpop.f32.mrb[0].mxu0
    %v2363 = vadd.f32 %v2322, %v2362
    %v2364 = vpop.f32.mrb[0].mxu0
    %v2365 = vadd.f32 %v2324, %v2364
    %v2366 = vpop.f32.mrb[0].mxu0
    %v2367 = vpop.f32.mrb[0].mxu0
    %2368 = vdwg.mxu0
    %2369 = vmatprep.subr.bf16.mxu0 %v1765
    %2370 = vmatpush1.bf16.msra.mxu0 %v1764
    %2371 = vmatprep.subr.bf16.mxu0 %v1769
    %2372 = vmatpush1.bf16.msra.mxu0 %v1768
    %2373 = vmatprep.subr.bf16.mxu0 %v1773
    %2374 = vmatpush1.bf16.msra.mxu0 %v1772
    %2375 = vmatprep.subr.bf16.mxu0 %v1777
    %2376 = vmatpush1.bf16.msra.mxu0 %v1776
    %2377 = vmatprep.subr.bf16.mxu0 %v1781
    %2378 = vmatpush1.bf16.msra.mxu0 %v1780
    %2379 = vmatprep.subr.bf16.mxu0 %v1785
    %2380 = vmatpush1.bf16.msra.mxu0 %v1784
    %2381 = vmatprep.subr.bf16.mxu0 %v1789
    %2382 = vmatpush1.bf16.msra.mxu0 %v1788
    %2383 = vmatprep.subr.bf16.mxu0 %v1793
    %2384 = vmatpush1.bf16.msra.mxu0 %v1792
    %2385 = vmatprep.subr.bf16.mxu0 %v1797
    %2386 = vmatpush1.bf16.msra.mxu0 %v1796
    %2387 = vmatprep.subr.bf16.mxu0 %v1801
    %2388 = vmatpush1.bf16.msra.mxu0 %v1800
    %2389 = vmatprep.subr.bf16.mxu0 %v1805
    %2390 = vmatpush1.bf16.msra.mxu0 %v1804
    %2391 = vmatprep.subr.bf16.mxu0 %v1809
    %2392 = vmatpush1.bf16.msra.mxu0 %v1808
    %2393 = vmatprep.subr.bf16.mxu0 %v1813
    %2394 = vmatpush1.bf16.msra.mxu0 %v1812
    %2395 = vmatprep.subr.bf16.mxu0 %v1817
    %2396 = vmatpush1.bf16.msra.mxu0 %v1816
    %2397 = vmatprep.subr.bf16.mxu0 %v1821
    %2398 = vmatpush1.bf16.msra.mxu0 %v1820
    %2399 = vmatprep.subr.bf16.mxu0 %v1825
    %2400 = vmatpush1.bf16.msra.mxu0 %v1824
    %2401 = vmatprep.mubr.bf16.mxu0 %v407
    %2402 = vmatmul.mubr.bf16.gmra.mrb[0].mxu0 %v406
    %v2403 = vpop.f32.mrb[0].mxu0
    %v2404 = vadd.f32 %v2363, %v2403
    %v2405 = vpop.f32.mrb[0].mxu0
    %v2406 = vadd.f32 %v2365, %v2405
    %v2407 = vpop.f32.mrb[0].mxu0
    %v2408 = vpop.f32.mrb[0].mxu0
    %2409 = vdwg.mxu0
    %v2410 = vpack.c.bf16 %v2240, %v2240
    %v2411 = vpack.c.bf16 %v2242, %v2242
    %v2412 = vpack.c.bf16 %v2404, %v2404
    %v2413 = vpack.c.bf16 %v2406, %v2406
    %v2414 = vmax.bf16 %v2410, 0
    %v2415 = vmax.bf16 %v2411, 0
    %v2416 = vmax.bf16 %v2412, 0
    %v2417 = vmax.bf16 %v2413, 0
    %v2418 = vld [vmem:[#allocation9] sm:$0xff]
    %v2419 = vld [vmem:[#allocation9 + $0x8] sm:$0xf]
    %v2420 = vld [vmem:[#allocation9 + $0xc] sm:$0xff]
    %v2421 = vld [vmem:[#allocation9 + $0x14] sm:$0xf]
    %v2422 = vld [vmem:[#allocation9 + $0x18] sm:$0xff]
    %v2423 = vld [vmem:[#allocation9 + $0x20] sm:$0xf]
    %v2424 = vld [vmem:[#allocation9 + $0x24] sm:$0xff]
    %v2425 = vld [vmem:[#allocation9 + $0x2c] sm:$0xf]
    %v2426 = vld [vmem:[#allocation9 + $0x30] sm:$0xff]
    %v2427 = vld [vmem:[#allocation9 + $0x38] sm:$0xf]
    %v2428 = vld [vmem:[#allocation9 + $0x3c] sm:$0xff]
    %v2429 = vld [vmem:[#allocation9 + $0x44] sm:$0xf]
    %v2430 = vld [vmem:[#allocation9 + $0x48] sm:$0xff]
    %v2431 = vld [vmem:[#allocation9 + $0x50] sm:$0xf]
    %v2432 = vld [vmem:[#allocation9 + $0x54] sm:$0xff]
    %v2433 = vld [vmem:[#allocation9 + $0x5c] sm:$0xf]
    %v2434 = vld [vmem:[#allocation9 + $0x60] sm:$0xff]
    %v2435 = vld [vmem:[#allocation9 + $0x68] sm:$0xf]
    %v2436 = vld [vmem:[#allocation9 + $0x6c] sm:$0xff]
    %v2437 = vld [vmem:[#allocation9 + $0x74] sm:$0xf]
    %v2438 = vld [vmem:[#allocation9 + $0x78] sm:$0xff]
    %v2439 = vld [vmem:[#allocation9 + $0x80] sm:$0xf]
    %v2440 = vld [vmem:[#allocation9 + $0x84] sm:$0xff]
    %v2441 = vld [vmem:[#allocation9 + $0x8c] sm:$0xf]
    %v2442 = vld [vmem:[#allocation9 + $0x90] sm:$0xff]
    %v2443 = vld [vmem:[#allocation9 + $0x98] sm:$0xf]
    %v2444 = vld [vmem:[#allocation9 + $0x9c] sm:$0xff]
    %v2445 = vld [vmem:[#allocation9 + $0xa4] sm:$0xf]
    %v2446 = vld [vmem:[#allocation9 + $0xa8] sm:$0xff]
    %v2447 = vld [vmem:[#allocation9 + $0xb0] sm:$0xf]
    %v2448 = vld [vmem:[#allocation9 + $0xb4] sm:$0xff]
    %v2449 = vld [vmem:[#allocation9 + $0xbc] sm:$0xf]
    %v2450 = vld [vmem:[#allocation9 + $0xc0] sm:$0xff]
    %v2451 = vld [vmem:[#allocation9 + $0xc8] sm:$0xf]
    %v2452 = vld [vmem:[#allocation9 + $0xcc] sm:$0xff]
    %v2453 = vld [vmem:[#allocation9 + $0xd4] sm:$0xf]
    %v2454 = vld [vmem:[#allocation9 + $0xd8] sm:$0xff]
    %v2455 = vld [vmem:[#allocation9 + $0xe0] sm:$0xf]
    %v2456 = vld [vmem:[#allocation9 + $0xe4] sm:$0xff]
    %v2457 = vld [vmem:[#allocation9 + $0xec] sm:$0xf]
    %v2458 = vld [vmem:[#allocation9 + $0xf0] sm:$0xff]
    %v2459 = vld [vmem:[#allocation9 + $0xf8] sm:$0xf]
    %v2460 = vld [vmem:[#allocation9 + $0xfc] sm:$0xff]
    %v2461 = vld [vmem:[#allocation9 + $0x104] sm:$0xf]
    %v2462 = vld [vmem:[#allocation9 + $0x108] sm:$0xff]
    %v2463 = vld [vmem:[#allocation9 + $0x110] sm:$0xf]
    %v2464 = vld [vmem:[#allocation9 + $0x114] sm:$0xff]
    %v2465 = vld [vmem:[#allocation9 + $0x11c] sm:$0xf]
    %v2466 = vld [vmem:[#allocation9 + $0x120] sm:$0xff]
    %v2467 = vld [vmem:[#allocation9 + $0x128] sm:$0xf]
    %v2468 = vld [vmem:[#allocation9 + $0x12c] sm:$0xff]
    %v2469 = vld [vmem:[#allocation9 + $0x134] sm:$0xf]
    %v2470 = vld [vmem:[#allocation9 + $0x138] sm:$0xff]
    %v2471 = vld [vmem:[#allocation9 + $0x140] sm:$0xf]
    %v2472 = vld [vmem:[#allocation9 + $0x144] sm:$0xff]
    %v2473 = vld [vmem:[#allocation9 + $0x14c] sm:$0xf]
    %v2474 = vld [vmem:[#allocation9 + $0x150] sm:$0xff]
    %v2475 = vld [vmem:[#allocation9 + $0x158] sm:$0xf]
    %v2476 = vld [vmem:[#allocation9 + $0x15c] sm:$0xff]
    %v2477 = vld [vmem:[#allocation9 + $0x164] sm:$0xf]
    %v2478 = vld [vmem:[#allocation9 + $0x168] sm:$0xff]
    %v2479 = vld [vmem:[#allocation9 + $0x170] sm:$0xf]
    %v2480 = vld [vmem:[#allocation9 + $0x174] sm:$0xff]
    %v2481 = vld [vmem:[#allocation9 + $0x17c] sm:$0xf]
    %v2482 = vld [vmem:[#allocation9 + $0x180] sm:$0xff]
    %v2483 = vld [vmem:[#allocation9 + $0x188] sm:$0xf]
    %v2484 = vld [vmem:[#allocation9 + $0x18c] sm:$0xff]
    %v2485 = vld [vmem:[#allocation9 + $0x194] sm:$0xf]
    %v2486 = vld [vmem:[#allocation9 + $0x198] sm:$0xff]
    %v2487 = vld [vmem:[#allocation9 + $0x1a0] sm:$0xf]
    %v2488 = vld [vmem:[#allocation9 + $0x1a4] sm:$0xff]
    %v2489 = vld [vmem:[#allocation9 + $0x1ac] sm:$0xf]
    %v2490 = vld [vmem:[#allocation9 + $0x1b0] sm:$0xff]
    %v2491 = vld [vmem:[#allocation9 + $0x1b8] sm:$0xf]
    %v2492 = vld [vmem:[#allocation9 + $0x1bc] sm:$0xff]
    %v2493 = vld [vmem:[#allocation9 + $0x1c4] sm:$0xf]
    %v2494 = vld [vmem:[#allocation9 + $0x1c8] sm:$0xff]
    %v2495 = vld [vmem:[#allocation9 + $0x1d0] sm:$0xf]
    %v2496 = vld [vmem:[#allocation9 + $0x1d4] sm:$0xff]
    %v2497 = vld [vmem:[#allocation9 + $0x1dc] sm:$0xf]
    %v2498 = vld [vmem:[#allocation9 + $0x1e0] sm:$0xff]
    %v2499 = vld [vmem:[#allocation9 + $0x1e8] sm:$0xf]
    %v2500 = vld [vmem:[#allocation9 + $0x1ec] sm:$0xff]
    %v2501 = vld [vmem:[#allocation9 + $0x1f4] sm:$0xf]
    %v2502 = vld [vmem:[#allocation9 + $0x1f8] sm:$0xff]
    %v2503 = vld [vmem:[#allocation9 + $0x200] sm:$0xf]
    %v2504 = vld [vmem:[#allocation9 + $0x204] sm:$0xff]
    %v2505 = vld [vmem:[#allocation9 + $0x20c] sm:$0xf]
    %v2506 = vld [vmem:[#allocation9 + $0x210] sm:$0xff]
    %v2507 = vld [vmem:[#allocation9 + $0x218] sm:$0xf]
    %v2508 = vld [vmem:[#allocation9 + $0x21c] sm:$0xff]
    %v2509 = vld [vmem:[#allocation9 + $0x224] sm:$0xf]
    %v2510 = vld [vmem:[#allocation9 + $0x228] sm:$0xff]
    %v2511 = vld [vmem:[#allocation9 + $0x230] sm:$0xf]
    %v2512 = vld [vmem:[#allocation9 + $0x234] sm:$0xff]
    %v2513 = vld [vmem:[#allocation9 + $0x23c] sm:$0xf]
    %v2514 = vld [vmem:[#allocation9 + $0x240] sm:$0xff]
    %v2515 = vld [vmem:[#allocation9 + $0x248] sm:$0xf]
    %v2516 = vld [vmem:[#allocation9 + $0x24c] sm:$0xff]
    %v2517 = vld [vmem:[#allocation9 + $0x254] sm:$0xf]
    %v2518 = vld [vmem:[#allocation9 + $0x258] sm:$0xff]
    %v2519 = vld [vmem:[#allocation9 + $0x260] sm:$0xf]
    %v2520 = vld [vmem:[#allocation9 + $0x264] sm:$0xff]
    %v2521 = vld [vmem:[#allocation9 + $0x26c] sm:$0xf]
    %v2522 = vld [vmem:[#allocation9 + $0x270] sm:$0xff]
    %v2523 = vld [vmem:[#allocation9 + $0x278] sm:$0xf]
    %v2524 = vld [vmem:[#allocation9 + $0x27c] sm:$0xff]
    %v2525 = vld [vmem:[#allocation9 + $0x284] sm:$0xf]
    %v2526 = vld [vmem:[#allocation9 + $0x288] sm:$0xff]
    %v2527 = vld [vmem:[#allocation9 + $0x290] sm:$0xf]
    %v2528 = vld [vmem:[#allocation9 + $0x294] sm:$0xff]
    %v2529 = vld [vmem:[#allocation9 + $0x29c] sm:$0xf]
    %v2530 = vld [vmem:[#allocation9 + $0x2a0] sm:$0xff]
    %v2531 = vld [vmem:[#allocation9 + $0x2a8] sm:$0xf]
    %v2532 = vld [vmem:[#allocation9 + $0x2ac] sm:$0xff]
    %v2533 = vld [vmem:[#allocation9 + $0x2b4] sm:$0xf]
    %v2534 = vld [vmem:[#allocation9 + $0x2b8] sm:$0xff]
    %v2535 = vld [vmem:[#allocation9 + $0x2c0] sm:$0xf]
    %v2536 = vld [vmem:[#allocation9 + $0x2c4] sm:$0xff]
    %v2537 = vld [vmem:[#allocation9 + $0x2cc] sm:$0xf]
    %v2538 = vld [vmem:[#allocation9 + $0x2d0] sm:$0xff]
    %v2539 = vld [vmem:[#allocation9 + $0x2d8] sm:$0xf]
    %v2540 = vld [vmem:[#allocation9 + $0x2dc] sm:$0xff]
    %v2541 = vld [vmem:[#allocation9 + $0x2e4] sm:$0xf]
    %v2542 = vld [vmem:[#allocation9 + $0x2e8] sm:$0xff]
    %v2543 = vld [vmem:[#allocation9 + $0x2f0] sm:$0xf]
    %v2544 = vld [vmem:[#allocation9 + $0x2f4] sm:$0xff]
    %v2545 = vld [vmem:[#allocation9 + $0x2fc] sm:$0xf]
    %v2674 = vunpack.c.l.b16 %v2418
    %v2675 = vunpack.c.h.b16 %v2418
    %v2676 = vunpack.c.l.b16 %v2419
    %v2677 = vunpack.c.l.b16 %v2420
    %v2678 = vunpack.c.h.b16 %v2420
    %v2679 = vunpack.c.l.b16 %v2421
    %v2680 = vunpack.c.l.b16 %v2422
    %v2681 = vunpack.c.h.b16 %v2422
    %v2682 = vunpack.c.l.b16 %v2423
    %v2683 = vunpack.c.l.b16 %v2424
    %v2684 = vunpack.c.h.b16 %v2424
    %v2685 = vunpack.c.l.b16 %v2425
    %v2686 = vunpack.c.l.b16 %v2426
    %v2687 = vunpack.c.h.b16 %v2426
    %v2688 = vunpack.c.l.b16 %v2427
    %v2689 = vunpack.c.l.b16 %v2428
    %v2690 = vunpack.c.h.b16 %v2428
    %v2691 = vunpack.c.l.b16 %v2429
    %v2692 = vunpack.c.l.b16 %v2430
    %v2693 = vunpack.c.h.b16 %v2430
    %v2694 = vunpack.c.l.b16 %v2431
    %v2695 = vunpack.c.l.b16 %v2432
    %v2696 = vunpack.c.h.b16 %v2432
    %v2697 = vunpack.c.l.b16 %v2433
    %v2698 = vunpack.c.l.b16 %v2434
    %v2699 = vunpack.c.h.b16 %v2434
    %v2700 = vunpack.c.l.b16 %v2435
    %v2701 = vunpack.c.l.b16 %v2436
    %v2702 = vunpack.c.h.b16 %v2436
    %v2703 = vunpack.c.l.b16 %v2437
    %v2704 = vunpack.c.l.b16 %v2438
    %v2705 = vunpack.c.h.b16 %v2438
    %v2706 = vunpack.c.l.b16 %v2439
    %v2707 = vunpack.c.l.b16 %v2440
    %v2708 = vunpack.c.h.b16 %v2440
    %v2709 = vunpack.c.l.b16 %v2441
    %v2710 = vunpack.c.l.b16 %v2442
    %v2711 = vunpack.c.h.b16 %v2442
    %v2712 = vunpack.c.l.b16 %v2443
    %v2713 = vunpack.c.l.b16 %v2444
    %v2714 = vunpack.c.h.b16 %v2444
    %v2715 = vunpack.c.l.b16 %v2445
    %v2716 = vunpack.c.l.b16 %v2446
    %v2717 = vunpack.c.h.b16 %v2446
    %v2718 = vunpack.c.l.b16 %v2447
    %v2719 = vunpack.c.l.b16 %v2448
    %v2720 = vunpack.c.h.b16 %v2448
    %v2721 = vunpack.c.l.b16 %v2449
    %v2722 = vunpack.c.l.b16 %v2450
    %v2723 = vunpack.c.h.b16 %v2450
    %v2724 = vunpack.c.l.b16 %v2451
    %v2725 = vunpack.c.l.b16 %v2452
    %v2726 = vunpack.c.h.b16 %v2452
    %v2727 = vunpack.c.l.b16 %v2453
    %v2728 = vunpack.c.l.b16 %v2454
    %v2729 = vunpack.c.h.b16 %v2454
    %v2730 = vunpack.c.l.b16 %v2455
    %v2731 = vunpack.c.l.b16 %v2456
    %v2732 = vunpack.c.h.b16 %v2456
    %v2733 = vunpack.c.l.b16 %v2457
    %v2734 = vunpack.c.l.b16 %v2458
    %v2735 = vunpack.c.h.b16 %v2458
    %v2736 = vunpack.c.l.b16 %v2459
    %v2737 = vunpack.c.l.b16 %v2460
    %v2738 = vunpack.c.h.b16 %v2460
    %v2739 = vunpack.c.l.b16 %v2461
    %v2740 = vunpack.c.l.b16 %v2462
    %v2741 = vunpack.c.h.b16 %v2462
    %v2742 = vunpack.c.l.b16 %v2463
    %v2743 = vunpack.c.l.b16 %v2464
    %v2744 = vunpack.c.h.b16 %v2464
    %v2745 = vunpack.c.l.b16 %v2465
    %v2746 = vunpack.c.l.b16 %v2466
    %v2747 = vunpack.c.h.b16 %v2466
    %v2748 = vunpack.c.l.b16 %v2467
    %v2749 = vunpack.c.l.b16 %v2468
    %v2750 = vunpack.c.h.b16 %v2468
    %v2751 = vunpack.c.l.b16 %v2469
    %v2752 = vunpack.c.l.b16 %v2470
    %v2753 = vunpack.c.h.b16 %v2470
    %v2754 = vunpack.c.l.b16 %v2471
    %v2755 = vunpack.c.l.b16 %v2472
    %v2756 = vunpack.c.h.b16 %v2472
    %v2757 = vunpack.c.l.b16 %v2473
    %v2758 = vunpack.c.l.b16 %v2474
    %v2759 = vunpack.c.h.b16 %v2474
    %v2760 = vunpack.c.l.b16 %v2475
    %v2761 = vunpack.c.l.b16 %v2476
    %v2762 = vunpack.c.h.b16 %v2476
    %v2763 = vunpack.c.l.b16 %v2477
    %v2764 = vunpack.c.l.b16 %v2478
    %v2765 = vunpack.c.h.b16 %v2478
    %v2766 = vunpack.c.l.b16 %v2479
    %v2767 = vunpack.c.l.b16 %v2480
    %v2768 = vunpack.c.h.b16 %v2480
    %v2769 = vunpack.c.l.b16 %v2481
    %v2770 = vunpack.c.l.b16 %v2482
    %v2771 = vunpack.c.h.b16 %v2482
    %v2772 = vunpack.c.l.b16 %v2483
    %v2773 = vunpack.c.l.b16 %v2484
    %v2774 = vunpack.c.h.b16 %v2484
    %v2775 = vunpack.c.l.b16 %v2485
    %v2776 = vunpack.c.l.b16 %v2486
    %v2777 = vunpack.c.h.b16 %v2486
    %v2778 = vunpack.c.l.b16 %v2487
    %v2779 = vunpack.c.l.b16 %v2488
    %v2780 = vunpack.c.h.b16 %v2488
    %v2781 = vunpack.c.l.b16 %v2489
    %v2782 = vunpack.c.l.b16 %v2490
    %v2783 = vunpack.c.h.b16 %v2490
    %v2784 = vunpack.c.l.b16 %v2491
    %v2785 = vunpack.c.l.b16 %v2492
    %v2786 = vunpack.c.h.b16 %v2492
    %v2787 = vunpack.c.l.b16 %v2493
    %v2788 = vunpack.c.l.b16 %v2494
    %v2789 = vunpack.c.h.b16 %v2494
    %v2790 = vunpack.c.l.b16 %v2495
    %v2791 = vunpack.c.l.b16 %v2496
    %v2792 = vunpack.c.h.b16 %v2496
    %v2793 = vunpack.c.l.b16 %v2497
    %v2794 = vunpack.c.l.b16 %v2498
    %v2795 = vunpack.c.h.b16 %v2498
    %v2796 = vunpack.c.l.b16 %v2499
    %v2797 = vunpack.c.l.b16 %v2500
    %v2798 = vunpack.c.h.b16 %v2500
    %v2799 = vunpack.c.l.b16 %v2501
    %v2800 = vunpack.c.l.b16 %v2502
    %v2801 = vunpack.c.h.b16 %v2502
    %v2802 = vunpack.c.l.b16 %v2503
    %v2803 = vunpack.c.l.b16 %v2504
    %v2804 = vunpack.c.h.b16 %v2504
    %v2805 = vunpack.c.l.b16 %v2505
    %v2806 = vunpack.c.l.b16 %v2506
    %v2807 = vunpack.c.h.b16 %v2506
    %v2808 = vunpack.c.l.b16 %v2507
    %v2809 = vunpack.c.l.b16 %v2508
    %v2810 = vunpack.c.h.b16 %v2508
    %v2811 = vunpack.c.l.b16 %v2509
    %v2812 = vunpack.c.l.b16 %v2510
    %v2813 = vunpack.c.h.b16 %v2510
    %v2814 = vunpack.c.l.b16 %v2511
    %v2815 = vunpack.c.l.b16 %v2512
    %v2816 = vunpack.c.h.b16 %v2512
    %v2817 = vunpack.c.l.b16 %v2513
    %v2818 = vunpack.c.l.b16 %v2514
    %v2819 = vunpack.c.h.b16 %v2514
    %v2820 = vunpack.c.l.b16 %v2515
    %v2821 = vunpack.c.l.b16 %v2516
    %v2822 = vunpack.c.h.b16 %v2516
    %v2823 = vunpack.c.l.b16 %v2517
    %v2824 = vunpack.c.l.b16 %v2518
    %v2825 = vunpack.c.h.b16 %v2518
    %v2826 = vunpack.c.l.b16 %v2519
    %v2827 = vunpack.c.l.b16 %v2520
    %v2828 = vunpack.c.h.b16 %v2520
    %v2829 = vunpack.c.l.b16 %v2521
    %v2830 = vunpack.c.l.b16 %v2522
    %v2831 = vunpack.c.h.b16 %v2522
    %v2832 = vunpack.c.l.b16 %v2523
    %v2833 = vunpack.c.l.b16 %v2524
    %v2834 = vunpack.c.h.b16 %v2524
    %v2835 = vunpack.c.l.b16 %v2525
    %v2836 = vunpack.c.l.b16 %v2526
    %v2837 = vunpack.c.h.b16 %v2526
    %v2838 = vunpack.c.l.b16 %v2527
    %v2839 = vunpack.c.l.b16 %v2528
    %v2840 = vunpack.c.h.b16 %v2528
    %v2841 = vunpack.c.l.b16 %v2529
    %v2842 = vunpack.c.l.b16 %v2530
    %v2843 = vunpack.c.h.b16 %v2530
    %v2844 = vunpack.c.l.b16 %v2531
    %v2845 = vunpack.c.l.b16 %v2532
    %v2846 = vunpack.c.h.b16 %v2532
    %v2847 = vunpack.c.l.b16 %v2533
    %v2848 = vunpack.c.l.b16 %v2534
    %v2849 = vunpack.c.h.b16 %v2534
    %v2850 = vunpack.c.l.b16 %v2535
    %v2851 = vunpack.c.l.b16 %v2536
    %v2852 = vunpack.c.h.b16 %v2536
    %v2853 = vunpack.c.l.b16 %v2537
    %v2854 = vunpack.c.l.b16 %v2538
    %v2855 = vunpack.c.h.b16 %v2538
    %v2856 = vunpack.c.l.b16 %v2539
    %v2857 = vunpack.c.l.b16 %v2540
    %v2858 = vunpack.c.h.b16 %v2540
    %v2859 = vunpack.c.l.b16 %v2541
    %v2860 = vunpack.c.l.b16 %v2542
    %v2861 = vunpack.c.h.b16 %v2542
    %v2862 = vunpack.c.l.b16 %v2543
    %v2863 = vunpack.c.l.b16 %v2544
    %v2864 = vunpack.c.h.b16 %v2544
    %v2865 = vunpack.c.l.b16 %v2545
    %v2866 = vpack.c.b16 %v2677, %v2674
    %v2867 = vpack.c.b16 %v2678, %v2675
    %v2868 = vpack.c.b16 %v2679, %v2676
    %v2869 = vpack.c.b16 %v2683, %v2680
    %v2870 = vpack.c.b16 %v2684, %v2681
    %v2871 = vpack.c.b16 %v2685, %v2682
    %v2872 = vpack.c.b16 %v2689, %v2686
    %v2873 = vpack.c.b16 %v2690, %v2687
    %v2874 = vpack.c.b16 %v2691, %v2688
    %v2875 = vpack.c.b16 %v2695, %v2692
    %v2876 = vpack.c.b16 %v2696, %v2693
    %v2877 = vpack.c.b16 %v2697, %v2694
    %v2878 = vpack.c.b16 %v2701, %v2698
    %v2879 = vpack.c.b16 %v2702, %v2699
    %v2880 = vpack.c.b16 %v2703, %v2700
    %v2881 = vpack.c.b16 %v2707, %v2704
    %v2882 = vpack.c.b16 %v2708, %v2705
    %v2883 = vpack.c.b16 %v2709, %v2706
    %v2884 = vpack.c.b16 %v2713, %v2710
    %v2885 = vpack.c.b16 %v2714, %v2711
    %v2886 = vpack.c.b16 %v2715, %v2712
    %v2887 = vpack.c.b16 %v2719, %v2716
    %v2888 = vpack.c.b16 %v2720, %v2717
    %v2889 = vpack.c.b16 %v2721, %v2718
    %v2890 = vpack.c.b16 %v2725, %v2722
    %v2891 = vpack.c.b16 %v2726, %v2723
    %v2892 = vpack.c.b16 %v2727, %v2724
    %v2893 = vpack.c.b16 %v2731, %v2728
    %v2894 = vpack.c.b16 %v2732, %v2729
    %v2895 = vpack.c.b16 %v2733, %v2730
    %v2896 = vpack.c.b16 %v2737, %v2734
    %v2897 = vpack.c.b16 %v2738, %v2735
    %v2898 = vpack.c.b16 %v2739, %v2736
    %v2899 = vpack.c.b16 %v2743, %v2740
    %v2900 = vpack.c.b16 %v2744, %v2741
    %v2901 = vpack.c.b16 %v2745, %v2742
    %v2902 = vpack.c.b16 %v2749, %v2746
    %v2903 = vpack.c.b16 %v2750, %v2747
    %v2904 = vpack.c.b16 %v2751, %v2748
    %v2905 = vpack.c.b16 %v2755, %v2752
    %v2906 = vpack.c.b16 %v2756, %v2753
    %v2907 = vpack.c.b16 %v2757, %v2754
    %v2908 = vpack.c.b16 %v2761, %v2758
    %v2909 = vpack.c.b16 %v2762, %v2759
    %v2910 = vpack.c.b16 %v2763, %v2760
    %v2911 = vpack.c.b16 %v2767, %v2764
    %v2912 = vpack.c.b16 %v2768, %v2765
    %v2913 = vpack.c.b16 %v2769, %v2766
    %v2914 = vpack.c.b16 %v2773, %v2770
    %v2915 = vpack.c.b16 %v2774, %v2771
    %v2916 = vpack.c.b16 %v2775, %v2772
    %v2917 = vpack.c.b16 %v2779, %v2776
    %v2918 = vpack.c.b16 %v2780, %v2777
    %v2919 = vpack.c.b16 %v2781, %v2778
    %v2920 = vpack.c.b16 %v2785, %v2782
    %v2921 = vpack.c.b16 %v2786, %v2783
    %v2922 = vpack.c.b16 %v2787, %v2784
    %v2923 = vpack.c.b16 %v2791, %v2788
    %v2924 = vpack.c.b16 %v2792, %v2789
    %v2925 = vpack.c.b16 %v2793, %v2790
    %v2926 = vpack.c.b16 %v2797, %v2794
    %v2927 = vpack.c.b16 %v2798, %v2795
    %v2928 = vpack.c.b16 %v2799, %v2796
    %v2929 = vpack.c.b16 %v2803, %v2800
    %v2930 = vpack.c.b16 %v2804, %v2801
    %v2931 = vpack.c.b16 %v2805, %v2802
    %v2932 = vpack.c.b16 %v2809, %v2806
    %v2933 = vpack.c.b16 %v2810, %v2807
    %v2934 = vpack.c.b16 %v2811, %v2808
    %v2935 = vpack.c.b16 %v2815, %v2812
    %v2936 = vpack.c.b16 %v2816, %v2813
    %v2937 = vpack.c.b16 %v2817, %v2814
    %v2938 = vpack.c.b16 %v2821, %v2818
    %v2939 = vpack.c.b16 %v2822, %v2819
    %v2940 = vpack.c.b16 %v2823, %v2820
    %v2941 = vpack.c.b16 %v2827, %v2824
    %v2942 = vpack.c.b16 %v2828, %v2825
    %v2943 = vpack.c.b16 %v2829, %v2826
    %v2944 = vpack.c.b16 %v2833, %v2830
    %v2945 = vpack.c.b16 %v2834, %v2831
    %v2946 = vpack.c.b16 %v2835, %v2832
    %v2947 = vpack.c.b16 %v2839, %v2836
    %v2948 = vpack.c.b16 %v2840, %v2837
    %v2949 = vpack.c.b16 %v2841, %v2838
    %v2950 = vpack.c.b16 %v2845, %v2842
    %v2951 = vpack.c.b16 %v2846, %v2843
    %v2952 = vpack.c.b16 %v2847, %v2844
    %v2953 = vpack.c.b16 %v2851, %v2848
    %v2954 = vpack.c.b16 %v2852, %v2849
    %v2955 = vpack.c.b16 %v2853, %v2850
    %v2956 = vpack.c.b16 %v2857, %v2854
    %v2957 = vpack.c.b16 %v2858, %v2855
    %v2958 = vpack.c.b16 %v2859, %v2856
    %v2959 = vpack.c.b16 %v2863, %v2860
    %v2960 = vpack.c.b16 %v2864, %v2861
    %v2961 = vpack.c.b16 %v2865, %v2862
    %3058 = vmatprep.subr.bf16.mxu0 %v2867
    %3059 = vmatpush1.bf16.msra.mxu0 %v2866
    %3060 = vmatprep.subr.bf16.mxu0 %v2870
    %3061 = vmatpush1.bf16.msra.mxu0 %v2869
    %3062 = vmatprep.subr.bf16.mxu0 %v2873
    %3063 = vmatpush1.bf16.msra.mxu0 %v2872
    %3064 = vmatprep.subr.bf16.mxu0 %v2876
    %3065 = vmatpush1.bf16.msra.mxu0 %v2875
    %3066 = vmatprep.subr.bf16.mxu0 %v2879
    %3067 = vmatpush1.bf16.msra.mxu0 %v2878
    %3068 = vmatprep.subr.bf16.mxu0 %v2882
    %3069 = vmatpush1.bf16.msra.mxu0 %v2881
    %3070 = vmatprep.subr.bf16.mxu0 %v2885
    %3071 = vmatpush1.bf16.msra.mxu0 %v2884
    %3072 = vmatprep.subr.bf16.mxu0 %v2888
    %3073 = vmatpush1.bf16.msra.mxu0 %v2887
    %3074 = vmatprep.subr.bf16.mxu0 %v2891
    %3075 = vmatpush1.bf16.msra.mxu0 %v2890
    %3076 = vmatprep.subr.bf16.mxu0 %v2894
    %3077 = vmatpush1.bf16.msra.mxu0 %v2893
    %3078 = vmatprep.subr.bf16.mxu0 %v2897
    %3079 = vmatpush1.bf16.msra.mxu0 %v2896
    %3080 = vmatprep.subr.bf16.mxu0 %v2900
    %3081 = vmatpush1.bf16.msra.mxu0 %v2899
    %3082 = vmatprep.subr.bf16.mxu0 %v2903
    %3083 = vmatpush1.bf16.msra.mxu0 %v2902
    %3084 = vmatprep.subr.bf16.mxu0 %v2906
    %3085 = vmatpush1.bf16.msra.mxu0 %v2905
    %3086 = vmatprep.subr.bf16.mxu0 %v2909
    %3087 = vmatpush1.bf16.msra.mxu0 %v2908
    %3088 = vmatprep.subr.bf16.mxu0 %v2912
    %3089 = vmatpush1.bf16.msra.mxu0 %v2911
    %3090 = vmatprep.mubr.bf16.mxu0 %v2415
    %3091 = vmatmul.mubr.bf16.gmra.mrb[0].mxu0 %v2414
    %v3092 = vpop.f32.mrb[0].mxu0
    %v3093 = vadd.f32 0.0, %v3092
    %v3094 = vpop.f32.mrb[0].mxu0
    %v3095 = vadd.f32 0.0, %v3094
    %v3096 = vpop.f32.mrb[0].mxu0
    %v3097 = vpop.f32.mrb[0].mxu0
    %3098 = vdwg.mxu0
    %3099 = vmatprep.subr.bf16.mxu0 %v2915
    %3100 = vmatpush1.bf16.msra.mxu0 %v2914
    %3101 = vmatprep.subr.bf16.mxu0 %v2918
    %3102 = vmatpush1.bf16.msra.mxu0 %v2917
    %3103 = vmatprep.subr.bf16.mxu0 %v2921
    %3104 = vmatpush1.bf16.msra.mxu0 %v2920
    %3105 = vmatprep.subr.bf16.mxu0 %v2924
    %3106 = vmatpush1.bf16.msra.mxu0 %v2923
    %3107 = vmatprep.subr.bf16.mxu0 %v2927
    %3108 = vmatpush1.bf16.msra.mxu0 %v2926
    %3109 = vmatprep.subr.bf16.mxu0 %v2930
    %3110 = vmatpush1.bf16.msra.mxu0 %v2929
    %3111 = vmatprep.subr.bf16.mxu0 %v2933
    %3112 = vmatpush1.bf16.msra.mxu0 %v2932
    %3113 = vmatprep.subr.bf16.mxu0 %v2936
    %3114 = vmatpush1.bf16.msra.mxu0 %v2935
    %3115 = vmatprep.subr.bf16.mxu0 %v2939
    %3116 = vmatpush1.bf16.msra.mxu0 %v2938
    %3117 = vmatprep.subr.bf16.mxu0 %v2942
    %3118 = vmatpush1.bf16.msra.mxu0 %v2941
    %3119 = vmatprep.subr.bf16.mxu0 %v2945
    %3120 = vmatpush1.bf16.msra.mxu0 %v2944
    %3121 = vmatprep.subr.bf16.mxu0 %v2948
    %3122 = vmatpush1.bf16.msra.mxu0 %v2947
    %3123 = vmatprep.subr.bf16.mxu0 %v2951
    %3124 = vmatpush1.bf16.msra.mxu0 %v2950
    %3125 = vmatprep.subr.bf16.mxu0 %v2954
    %3126 = vmatpush1.bf16.msra.mxu0 %v2953
    %3127 = vmatprep.subr.bf16.mxu0 %v2957
    %3128 = vmatpush1.bf16.msra.mxu0 %v2956
    %3129 = vmatprep.subr.bf16.mxu0 %v2960
    %3130 = vmatpush1.bf16.msra.mxu0 %v2959
    %3131 = vmatprep.mubr.bf16.mxu0 %v2417
    %3132 = vmatmul.mubr.bf16.gmra.mrb[0].mxu0 %v2416
    %v3133 = vpop.f32.mrb[0].mxu0
    %v3134 = vadd.f32 %v3093, %v3133
    %v3135 = vpop.f32.mrb[0].mxu0
    %v3136 = vadd.f32 %v3095, %v3135
    %v3137 = vpop.f32.mrb[0].mxu0
    %v3138 = vpop.f32.mrb[0].mxu0
    %3139 = vdwg.mxu0
    %3140 = vmatprep.subr.bf16.mxu0 0
    %3141 = vmatpush1.bf16.msra.mxu0 %v2868
    %3142 = vmatprep.subr.bf16.mxu0 0
    %3143 = vmatpush1.bf16.msra.mxu0 %v2871
    %3144 = vmatprep.subr.bf16.mxu0 0
    %3145 = vmatpush1.bf16.msra.mxu0 %v2874
    %3146 = vmatprep.subr.bf16.mxu0 0
    %3147 = vmatpush1.bf16.msra.mxu0 %v2877
    %3148 = vmatprep.subr.bf16.mxu0 0
    %3149 = vmatpush1.bf16.msra.mxu0 %v2880
    %3150 = vmatprep.subr.bf16.mxu0 0
    %3151 = vmatpush1.bf16.msra.mxu0 %v2883
    %3152 = vmatprep.subr.bf16.mxu0 0
    %3153 = vmatpush1.bf16.msra.mxu0 %v2886
    %3154 = vmatprep.subr.bf16.mxu0 0
    %3155 = vmatpush1.bf16.msra.mxu0 %v2889
    %3156 = vmatprep.subr.bf16.mxu0 0
    %3157 = vmatpush1.bf16.msra.mxu0 %v2892
    %3158 = vmatprep.subr.bf16.mxu0 0
    %3159 = vmatpush1.bf16.msra.mxu0 %v2895
    %3160 = vmatprep.subr.bf16.mxu0 0
    %3161 = vmatpush1.bf16.msra.mxu0 %v2898
    %3162 = vmatprep.subr.bf16.mxu0 0
    %3163 = vmatpush1.bf16.msra.mxu0 %v2901
    %3164 = vmatprep.subr.bf16.mxu0 0
    %3165 = vmatpush1.bf16.msra.mxu0 %v2904
    %3166 = vmatprep.subr.bf16.mxu0 0
    %3167 = vmatpush1.bf16.msra.mxu0 %v2907
    %3168 = vmatprep.subr.bf16.mxu0 0
    %3169 = vmatpush1.bf16.msra.mxu0 %v2910
    %3170 = vmatprep.subr.bf16.mxu0 0
    %3171 = vmatpush1.bf16.msra.mxu0 %v2913
    %3172 = vmatprep.mubr.bf16.mxu0 %v2415
    %3173 = vmatmul.mubr.bf16.gmra.mrb[0].mxu0 %v2414
    %v3174 = vpop.f32.mrb[0].mxu0
    %v3175 = vadd.f32 0.0, %v3174
    %v3176 = vpop.f32.mrb[0].mxu0
    %v3177 = vpop.f32.mrb[0].mxu0
    %v3178 = vpop.f32.mrb[0].mxu0
    %3179 = vdwg.mxu0
    %3180 = vmatprep.subr.bf16.mxu0 0
    %3181 = vmatpush1.bf16.msra.mxu0 %v2916
    %3182 = vmatprep.subr.bf16.mxu0 0
    %3183 = vmatpush1.bf16.msra.mxu0 %v2919
    %3184 = vmatprep.subr.bf16.mxu0 0
    %3185 = vmatpush1.bf16.msra.mxu0 %v2922
    %3186 = vmatprep.subr.bf16.mxu0 0
    %3187 = vmatpush1.bf16.msra.mxu0 %v2925
    %3188 = vmatprep.subr.bf16.mxu0 0
    %3189 = vmatpush1.bf16.msra.mxu0 %v2928
    %3190 = vmatprep.subr.bf16.mxu0 0
    %3191 = vmatpush1.bf16.msra.mxu0 %v2931
    %3192 = vmatprep.subr.bf16.mxu0 0
    %3193 = vmatpush1.bf16.msra.mxu0 %v2934
    %3194 = vmatprep.subr.bf16.mxu0 0
    %3195 = vmatpush1.bf16.msra.mxu0 %v2937
    %3196 = vmatprep.subr.bf16.mxu0 0
    %3197 = vmatpush1.bf16.msra.mxu0 %v2940
    %3198 = vmatprep.subr.bf16.mxu0 0
    %3199 = vmatpush1.bf16.msra.mxu0 %v2943
    %3200 = vmatprep.subr.bf16.mxu0 0
    %3201 = vmatpush1.bf16.msra.mxu0 %v2946
    %3202 = vmatprep.subr.bf16.mxu0 0
    %3203 = vmatpush1.bf16.msra.mxu0 %v2949
    %3204 = vmatprep.subr.bf16.mxu0 0
    %3205 = vmatpush1.bf16.msra.mxu0 %v2952
    %3206 = vmatprep.subr.bf16.mxu0 0
    %3207 = vmatpush1.bf16.msra.mxu0 %v2955
    %3208 = vmatprep.subr.bf16.mxu0 0
    %3209 = vmatpush1.bf16.msra.mxu0 %v2958
    %3210 = vmatprep.subr.bf16.mxu0 0
    %3211 = vmatpush1.bf16.msra.mxu0 %v2961
    %3212 = vmatprep.mubr.bf16.mxu0 %v2417
    %3213 = vmatmul.mubr.bf16.gmra.mrb[0].mxu0 %v2416
    %v3214 = vpop.f32.mrb[0].mxu0
    %v3215 = vadd.f32 %v3175, %v3214
    %v3216 = vpop.f32.mrb[0].mxu0
    %v3217 = vpop.f32.mrb[0].mxu0
    %v3218 = vpop.f32.mrb[0].mxu0
    %3219 = vdwg.mxu0
    %v3220 = vpack.c.bf16 %v3134, %v3134
    %v3221 = vpack.c.bf16 %v3136, %v3136
    %v3222 = vpack.c.bf16 %v3215, %v3215
    %v3223 = vld [vmem:[%s5] sm:$0x7]
    %v3226 = vunpack.c.l.s4 1966171168
    %v3227 = vunpack.c.0.s8 %v3226
    %v3228 = vlaneseq
    %v3229 = vshrl.u32 %v3228, 7
    %v3230 = vsub.s32 %v3227, %v3229
    %v3231 = vrot.slane %v3223, %v3230
    %v3232 = vcombine.high %v3231, %v3231
    %v3234 = vunpack.c.l.s4 1966171168
    %v3235 = vunpack.c.0.s8 %v3234
    %v3236 = vlaneseq
    %v3237 = vshrl.u32 %v3236, 7
    %v3238 = vsub.s32 %v3235, %v3237
    %v3239 = vrot.slane %v3231, %v3238
    %v3241 = vunpack.c.l.s4 1966171168
    %v3242 = vunpack.c.0.s8 %v3241
    %v3243 = vlaneseq
    %v3244 = vshrl.u32 %v3243, 7
    %v3245 = vsub.s32 %v3242, %v3244
    %v3246 = vrot.slane %v3232, %v3245
    %v3247 = vcombine.high %v3239, %v3239
    %v3249 = vpack.i.b16 %v3239, %v3239
    %v3251 = vlaneseq
    %v3252 = vshrl.u32 %v3251, 7
    %v3253 = vsub.s32 0, %v3252
    %v3254 = vrot.slane %v3249, %v3253
    %v3256 = vpack.i.b16 %v3246, %v3246
    %v3258 = vlaneseq
    %v3259 = vshrl.u32 %v3258, 7
    %v3260 = vsub.s32 0, %v3259
    %v3261 = vrot.slane %v3256, %v3260
    %v3263 = vpack.i.b16 %v3247, %v3247
    %v3265 = vlaneseq
    %v3266 = vshrl.u32 %v3265, 7
    %v3267 = vsub.s32 0, %v3266
    %v3268 = vrot.slane %v3263, %v3267
    %v3269 = vadd.bf16 %v3220, %v3254
    %v3270 = vadd.bf16 %v3221, %v3261
    %v3271 = vadd.bf16 %v3222, %v3268
    %v3272 = vmax.bf16 %v3269, 0
    %v3273 = vmax.bf16 %v3270, 0
    %v3274 = vmax.bf16 %v3271, 0
    %v3275 = vld [vmem:[#allocation10] sm:$0xf]
    %v3276 = vld [vmem:[#allocation10 + $0x4] sm:$0xf]
    %v3277 = vld [vmem:[#allocation10 + $0x8] sm:$0xf]
    %v3278 = vld [vmem:[#allocation10 + $0xc] sm:$0xf]
    %v3279 = vld [vmem:[#allocation10 + $0x10] sm:$0xf]
    %v3280 = vld [vmem:[#allocation10 + $0x14] sm:$0xf]
    %v3281 = vld [vmem:[#allocation10 + $0x18] sm:$0xf]
    %v3282 = vld [vmem:[#allocation10 + $0x1c] sm:$0xf]
    %v3283 = vld [vmem:[#allocation10 + $0x20] sm:$0xf]
    %v3284 = vld [vmem:[#allocation10 + $0x24] sm:$0xf]
    %v3285 = vld [vmem:[#allocation10 + $0x28] sm:$0xf]
    %v3286 = vld [vmem:[#allocation10 + $0x2c] sm:$0xf]
    %v3287 = vld [vmem:[#allocation10 + $0x30] sm:$0xf]
    %v3288 = vld [vmem:[#allocation10 + $0x34] sm:$0xf]
    %v3289 = vld [vmem:[#allocation10 + $0x38] sm:$0xf]
    %v3290 = vld [vmem:[#allocation10 + $0x3c] sm:$0xf]
    %v3291 = vld [vmem:[#allocation10 + $0x40] sm:$0xf]
    %v3292 = vld [vmem:[#allocation10 + $0x44] sm:$0xf]
    %v3293 = vld [vmem:[#allocation10 + $0x48] sm:$0xf]
    %v3294 = vld [vmem:[#allocation10 + $0x4c] sm:$0xf]
    %v3295 = vld [vmem:[#allocation10 + $0x50] sm:$0xf]
    %v3296 = vld [vmem:[#allocation10 + $0x54] sm:$0xf]
    %v3297 = vld [vmem:[#allocation10 + $0x58] sm:$0xf]
    %v3298 = vld [vmem:[#allocation10 + $0x5c] sm:$0xf]
    %v3299 = vld [vmem:[#allocation10 + $0x60] sm:$0xf]
    %v3300 = vld [vmem:[#allocation10 + $0x64] sm:$0xf]
    %v3301 = vld [vmem:[#allocation10 + $0x68] sm:$0xf]
    %v3302 = vld [vmem:[#allocation10 + $0x6c] sm:$0xf]
    %v3303 = vld [vmem:[#allocation10 + $0x70] sm:$0xf]
    %v3304 = vld [vmem:[#allocation10 + $0x74] sm:$0xf]
    %v3305 = vld [vmem:[#allocation10 + $0x78] sm:$0xf]
    %v3306 = vld [vmem:[#allocation10 + $0x7c] sm:$0xf]
    %v3307 = vld [vmem:[#allocation10 + $0x80] sm:$0xf]
    %v3308 = vld [vmem:[#allocation10 + $0x84] sm:$0xf]
    %v3309 = vld [vmem:[#allocation10 + $0x88] sm:$0xf]
    %v3310 = vld [vmem:[#allocation10 + $0x8c] sm:$0xf]
    %v3311 = vld [vmem:[#allocation10 + $0x90] sm:$0xf]
    %v3312 = vld [vmem:[#allocation10 + $0x94] sm:$0xf]
    %v3313 = vld [vmem:[#allocation10 + $0x98] sm:$0xf]
    %v3314 = vld [vmem:[#allocation10 + $0x9c] sm:$0xf]
    %v3315 = vld [vmem:[#allocation10 + $0xa0] sm:$0xf]
    %v3316 = vld [vmem:[#allocation10 + $0xa4] sm:$0xf]
    %v3317 = vld [vmem:[#allocation10 + $0xa8] sm:$0xf]
    %v3318 = vld [vmem:[#allocation10 + $0xac] sm:$0xf]
    %v3319 = vld [vmem:[#allocation10 + $0xb0] sm:$0xf]
    %v3320 = vld [vmem:[#allocation10 + $0xb4] sm:$0xf]
    %v3321 = vld [vmem:[#allocation10 + $0xb8] sm:$0xf]
    %v3322 = vld [vmem:[#allocation10 + $0xbc] sm:$0xf]
    %v3371 = vunpack.c.l.b16 %v3275
    %v3372 = vunpack.c.l.b16 %v3276
    %v3373 = vunpack.c.l.b16 %v3277
    %v3374 = vunpack.c.l.b16 %v3278
    %v3375 = vunpack.c.l.b16 %v3279
    %v3376 = vunpack.c.l.b16 %v3280
    %v3377 = vunpack.c.l.b16 %v3281
    %v3378 = vunpack.c.l.b16 %v3282
    %v3379 = vunpack.c.l.b16 %v3283
    %v3380 = vunpack.c.l.b16 %v3284
    %v3381 = vunpack.c.l.b16 %v3285
    %v3382 = vunpack.c.l.b16 %v3286
    %v3383 = vunpack.c.l.b16 %v3287
    %v3384 = vunpack.c.l.b16 %v3288
    %v3385 = vunpack.c.l.b16 %v3289
    %v3386 = vunpack.c.l.b16 %v3290
    %v3387 = vunpack.c.l.b16 %v3291
    %v3388 = vunpack.c.l.b16 %v3292
    %v3389 = vunpack.c.l.b16 %v3293
    %v3390 = vunpack.c.l.b16 %v3294
    %v3391 = vunpack.c.l.b16 %v3295
    %v3392 = vunpack.c.l.b16 %v3296
    %v3393 = vunpack.c.l.b16 %v3297
    %v3394 = vunpack.c.l.b16 %v3298
    %v3395 = vunpack.c.l.b16 %v3299
    %v3396 = vunpack.c.l.b16 %v3300
    %v3397 = vunpack.c.l.b16 %v3301
    %v3398 = vunpack.c.l.b16 %v3302
    %v3399 = vunpack.c.l.b16 %v3303
    %v3400 = vunpack.c.l.b16 %v3304
    %v3401 = vunpack.c.l.b16 %v3305
    %v3402 = vunpack.c.l.b16 %v3306
    %v3403 = vunpack.c.l.b16 %v3307
    %v3404 = vunpack.c.l.b16 %v3308
    %v3405 = vunpack.c.l.b16 %v3309
    %v3406 = vunpack.c.l.b16 %v3310
    %v3407 = vunpack.c.l.b16 %v3311
    %v3408 = vunpack.c.l.b16 %v3312
    %v3409 = vunpack.c.l.b16 %v3313
    %v3410 = vunpack.c.l.b16 %v3314
    %v3411 = vunpack.c.l.b16 %v3315
    %v3412 = vunpack.c.l.b16 %v3316
    %v3413 = vunpack.c.l.b16 %v3317
    %v3414 = vunpack.c.l.b16 %v3318
    %v3415 = vunpack.c.l.b16 %v3319
    %v3416 = vunpack.c.l.b16 %v3320
    %v3417 = vunpack.c.l.b16 %v3321
    %v3418 = vunpack.c.l.b16 %v3322
    %v3419 = vpack.c.b16 %v3372, %v3371
    %v3420 = vpack.c.b16 %v3374, %v3373
    %v3421 = vpack.c.b16 %v3376, %v3375
    %v3422 = vpack.c.b16 %v3378, %v3377
    %v3423 = vpack.c.b16 %v3380, %v3379
    %v3424 = vpack.c.b16 %v3382, %v3381
    %v3425 = vpack.c.b16 %v3384, %v3383
    %v3426 = vpack.c.b16 %v3386, %v3385
    %v3427 = vpack.c.b16 %v3388, %v3387
    %v3428 = vpack.c.b16 %v3390, %v3389
    %v3429 = vpack.c.b16 %v3392, %v3391
    %v3430 = vpack.c.b16 %v3394, %v3393
    %v3431 = vpack.c.b16 %v3396, %v3395
    %v3432 = vpack.c.b16 %v3398, %v3397
    %v3433 = vpack.c.b16 %v3400, %v3399
    %v3434 = vpack.c.b16 %v3402, %v3401
    %v3435 = vpack.c.b16 %v3404, %v3403
    %v3436 = vpack.c.b16 %v3406, %v3405
    %v3437 = vpack.c.b16 %v3408, %v3407
    %v3438 = vpack.c.b16 %v3410, %v3409
    %v3439 = vpack.c.b16 %v3412, %v3411
    %v3440 = vpack.c.b16 %v3414, %v3413
    %v3441 = vpack.c.b16 %v3416, %v3415
    %v3442 = vpack.c.b16 %v3418, %v3417
    %3467 = vmatprep.subr.bf16.mxu0 0
    %3468 = vmatpush1.bf16.msra.mxu0 %v3419
    %3469 = vmatprep.subr.bf16.mxu0 0
    %3470 = vmatpush1.bf16.msra.mxu0 %v3420
    %3471 = vmatprep.subr.bf16.mxu0 0
    %3472 = vmatpush1.bf16.msra.mxu0 %v3421
    %3473 = vmatprep.subr.bf16.mxu0 0
    %3474 = vmatpush1.bf16.msra.mxu0 %v3422
    %3475 = vmatprep.subr.bf16.mxu0 0
    %3476 = vmatpush1.bf16.msra.mxu0 %v3423
    %3477 = vmatprep.subr.bf16.mxu0 0
    %3478 = vmatpush1.bf16.msra.mxu0 %v3424
    %3479 = vmatprep.subr.bf16.mxu0 0
    %3480 = vmatpush1.bf16.msra.mxu0 %v3425
    %3481 = vmatprep.subr.bf16.mxu0 0
    %3482 = vmatpush1.bf16.msra.mxu0 %v3426
    %3483 = vmatprep.subr.bf16.mxu0 0
    %3484 = vmatpush1.bf16.msra.mxu0 %v3427
    %3485 = vmatprep.subr.bf16.mxu0 0
    %3486 = vmatpush1.bf16.msra.mxu0 %v3428
    %3487 = vmatprep.subr.bf16.mxu0 0
    %3488 = vmatpush1.bf16.msra.mxu0 %v3429
    %3489 = vmatprep.subr.bf16.mxu0 0
    %3490 = vmatpush1.bf16.msra.mxu0 %v3430
    %3491 = vmatprep.subr.bf16.mxu0 0
    %3492 = vmatpush1.bf16.msra.mxu0 %v3431
    %3493 = vmatprep.subr.bf16.mxu0 0
    %3494 = vmatpush1.bf16.msra.mxu0 %v3432
    %3495 = vmatprep.subr.bf16.mxu0 0
    %3496 = vmatpush1.bf16.msra.mxu0 %v3433
    %3497 = vmatprep.subr.bf16.mxu0 0
    %3498 = vmatpush1.bf16.msra.mxu0 %v3434
    %3499 = vmatprep.mubr.bf16.mxu0 %v3273
    %3500 = vmatmul.mubr.bf16.gmra.mrb[0].mxu0 %v3272
    %v3501 = vpop.f32.mrb[0].mxu0
    %v3502 = vadd.f32 0.0, %v3501
    %v3503 = vpop.f32.mrb[0].mxu0
    %v3504 = vpop.f32.mrb[0].mxu0
    %v3505 = vpop.f32.mrb[0].mxu0
    %3506 = vdwg.mxu0
    %3507 = vmatprep.subr.bf16.mxu0 0
    %3508 = vmatpush1.bf16.msra.mxu0 %v3435
    %3509 = vmatprep.subr.bf16.mxu0 0
    %3510 = vmatpush1.bf16.msra.mxu0 %v3436
    %3511 = vmatprep.subr.bf16.mxu0 0
    %3512 = vmatpush1.bf16.msra.mxu0 %v3437
    %3513 = vmatprep.subr.bf16.mxu0 0
    %3514 = vmatpush1.bf16.msra.mxu0 %v3438
    %3515 = vmatprep.subr.bf16.mxu0 0
    %3516 = vmatpush1.bf16.msra.mxu0 %v3439
    %3517 = vmatprep.subr.bf16.mxu0 0
    %3518 = vmatpush1.bf16.msra.mxu0 %v3440
    %3519 = vmatprep.subr.bf16.mxu0 0
    %3520 = vmatpush1.bf16.msra.mxu0 %v3441
    %3521 = vmatprep.subr.bf16.mxu0 0
    %3522 = vmatpush1.bf16.msra.mxu0 %v3442
    %3523 = vmatprep.subr.bf16.mxu0 0
    %3524 = vmatpush1.bf16.msra.mxu0 0
    %3525 = vmatprep.subr.bf16.mxu0 0
    %3526 = vmatpush1.bf16.msra.mxu0 0
    %3527 = vmatprep.subr.bf16.mxu0 0
    %3528 = vmatpush1.bf16.msra.mxu0 0
    %3529 = vmatprep.subr.bf16.mxu0 0
    %3530 = vmatpush1.bf16.msra.mxu0 0
    %3531 = vmatprep.subr.bf16.mxu0 0
    %3532 = vmatpush1.bf16.msra.mxu0 0
    %3533 = vmatprep.subr.bf16.mxu0 0
    %3534 = vmatpush1.bf16.msra.mxu0 0
    %3535 = vmatprep.subr.bf16.mxu0 0
    %3536 = vmatpush1.bf16.msra.mxu0 0
    %3537 = vmatprep.subr.bf16.mxu0 0
    %3538 = vmatpush1.bf16.msra.mxu0 0
    %3539 = vmatprep.mubr.bf16.mxu0 0
    %3540 = vmatmul.mubr.bf16.gmra.mrb[0].mxu0 %v3274
    %v3541 = vpop.f32.mrb[0].mxu0
    %v3542 = vadd.f32 %v3502, %v3541
    %v3543 = vpop.f32.mrb[0].mxu0
    %v3544 = vpop.f32.mrb[0].mxu0
    %v3545 = vpop.f32.mrb[0].mxu0
    %3546 = vdwg.mxu0
    %vm3547 = vcmask 7168
    %3548 = vst.msk [vmem:[%s7] sm:$0xff] %vm3547, %v3542
    // Predicated region
    $region54: #{tpu_custom_call.1} parent=1 // pred_check
      _
    $region55: #{tpu_custom_call.1} parent=1 // pred_check_branch
      %3550 = sbr.rel (0) target = $region57
    $region56: #{tpu_custom_call.1} parent=1 // pred_region
      _
    $region57: #{tpu_custom_call.1} parent=1 // pred_fallthru
      _
    // Predicated region
    $region58: #{tpu_custom_call.1} parent=1 // pred_check
      _
    $region59: #{tpu_custom_call.1} parent=1 // pred_check_branch
      %3552 = sbr.rel (0) target = $region61
    $region60: #{tpu_custom_call.1} parent=1 // pred_region
      _
    $region61: #{tpu_custom_call.1} parent=1 // pred_fallthru
      _
    %3553 = vsyncpa [#allocation3], 1
    %3554 = vsyncpa [#allocation5], 1
    %3555 = vsyncpa [#allocation8], 1
    %3556 = vsyncpa [#allocation11], 1

</llo_original>
